<compile_context>
chip_gen: v7x
topology: tpu7x:2x2x1
jax: 0.10.0
libtpu: 0.0.40
codegen_flags: <defaults>
</compile_context>

<pallas_src>
import jax
import jax.numpy as jnp
from jax.experimental import pallas as pl
from jax.experimental.pallas import tpu as pltpu

# Hyper-parameters mirroring CNN_LSTM(input_size, n_filters, hidden_size,
# time_step) with n_filters == hidden_size (as the PyTorch module assumes).
INPUT_SIZE = 16      # L : per-timestep signal length
N_FILTERS = 32       # C1: conv1 out channels (conv2 out channels = C1 // 2)
HIDDEN_SIZE = 32     # H : LSTM hidden size
TIME_STEP = 8        # T
BATCH = 2            # B

F2 = N_FILTERS // 2
L2 = INPUT_SIZE // 2
L4 = INPUT_SIZE // 4
LSTM_IN = F2 * L4    # floor(hidden/2) * floor(input_size/4) = 64


# ----------------------------------------------------------------------------
# The single fused kernel.
# ----------------------------------------------------------------------------
def _cnn_lstm_kernel(x_ref, k1_ref, b1_ref, k2_ref, b2_ref,
                     wih_ref, whh_ref, bl_ref,
                     wfc1_ref, bfc1_ref, wfc2_ref, bfc2_ref, out_ref):
    """Shapes:
      x_ref    (T*B, L)        rows ordered t*B + b (time-major)
      k1_ref   (L, L*C1)       conv1 as banded matmul; cols = (pos, chan)
      b1_ref   (1, L*C1)
      k2_ref   (L*C1, L2*C2)   conv2 (+ pooled-column selection) as matmul
      b2_ref   (1, L2*C2)
      wih_ref  (L2*C2, 4H)     W_ih^T with channel-major flatten folded in
      whh_ref  (H, 4H)    bl_ref (1, 4H)
      wfc1_ref (H, 16)    bfc1_ref (1, 16)   wfc2_ref (16, 2)   bfc2_ref (1, 2)
      out_ref  (B, 2)
    Gate order follows PyTorch: [i, f, g, o]."""
    rows, seq_len = x_ref.shape
    c1 = b1_ref.shape[1] // seq_len             # conv1 out channels
    c2 = b2_ref.shape[1] // (seq_len // 2)      # conv2 out channels
    batch = out_ref.shape[0]
    hid = whh_ref.shape[0]

    # --- conv1 + bias + ReLU : one MXU op -----------------------------------
    h1 = jnp.maximum(
        jnp.dot(x_ref[...], k1_ref[...], preferred_element_type=jnp.float32)
        + b1_ref[...], 0.0)
    # MaxPool1d(2,2): max with the next spatial position (shift by c1 lanes).
    # Only even-position column blocks are meaningful; k2 zeroes the rest.
    h1s = jnp.concatenate([h1[:, c1:], jnp.zeros((rows, c1), h1.dtype)], axis=1)
    p1 = jnp.maximum(h1, h1s)

    # --- conv2 + bias + ReLU + pool -----------------------------------------
    h2 = jnp.maximum(
        jnp.dot(p1, k2_ref[...], preferred_element_type=jnp.float32)
        + b2_ref[...], 0.0)
    h2s = jnp.concatenate([h2[:, c2:], jnp.zeros((rows, c2), h2.dtype)], axis=1)
    p2 = jnp.maximum(h2, h2s)

    # --- LSTM: input projection hoisted out of the recurrence ---------------
    # Row t*batch + b of gates_x holds the x-side gates of sample b at step t.
    gates_x = (jnp.dot(p2, wih_ref[...], preferred_element_type=jnp.float32)
               + bl_ref[...])

    whh = whh_ref[...]
    h = jnp.zeros((batch, hid), jnp.float32)
    c = jnp.zeros((batch, hid), jnp.float32)
    nsteps = rows // batch
    for t in range(nsteps):                     # static unroll, T is small
        g = gates_x[t * batch:(t + 1) * batch, :] + jnp.dot(
            h, whh, preferred_element_type=jnp.float32)
        sg = jax.nn.sigmoid(g)                  # full 128-lane EUP ops, then
        tg = jnp.tanh(g)                        # static 32-lane gate slices
        i_g = sg[:, 0 * hid:1 * hid]
        f_g = sg[:, 1 * hid:2 * hid]
        g_g = tg[:, 2 * hid:3 * hid]
        o_g = sg[:, 3 * hid:4 * hid]
        c = f_g * c + i_g * g_g
        h = o_g * jnp.tanh(c)

    # --- FC head: Linear(H,16) -> ReLU -> Linear(16,2) ----------------------
    z = jnp.maximum(
        jnp.dot(h, wfc1_ref[...], preferred_element_type=jnp.float32)
        + bfc1_ref[...], 0.0)
    out_ref[...] = (jnp.dot(z, wfc2_ref[...], preferred_element_type=jnp.float32)
                    + bfc2_ref[...])


def cnn_lstm_forward(x, params):
    """x: (B, T, INPUT_SIZE) float32 -> (B, 2)."""
    b, t, l = x.shape
    # Time-major rows (t*B + b): each LSTM step then reads a contiguous row
    # block of the precomputed gate matrix (no per-step gathers).
    x_tm = jnp.transpose(x, (1, 0, 2)).reshape(t * b, l)
    vmem = pl.BlockSpec(memory_space=pltpu.MemorySpace.VMEM)
    return pl.pallas_call(
        _cnn_lstm_kernel,
        out_shape=jax.ShapeDtypeStruct((b, 2), jnp.float32),
        in_specs=[vmem] * 12,
        out_specs=vmem,
    )(x_tm, params["k1"], params["b1"], params["k2"], params["b2"],
      params["wih_eff"], params["whh_t"], params["b_lstm"],
      params["wfc1"], params["bfc1"], params["wfc2"], params["bfc2"])


# ----------------------------------------------------------------------------
# Parameters: PyTorch-shaped raw params + one-time host-side folding.
# ----------------------------------------------------------------------------
def init_raw_params(key):
    ks = jax.random.split(key, 10)
    s = 0.1
    return {
        "w1": jax.random.normal(ks[0], (N_FILTERS, 1, 5), jnp.float32) * s,
        "b1": jax.random.normal(ks[1], (N_FILTERS,), jnp.float32) * s,
        "w2": jax.random.normal(ks[2], (F2, N_FILTERS, 5), jnp.float32) * s,
        "b2": jax.random.normal(ks[3], (F2,), jnp.float32) * s,
        "wih": jax.random.normal(ks[4], (4 * HIDDEN_SIZE, LSTM_IN), jnp.float32) * s,
        "whh": jax.random.normal(ks[5], (4 * HIDDEN_SIZE, HIDDEN_SIZE), jnp.float32) * s,
        "bih": jax.random.normal(ks[6], (4 * HIDDEN_SIZE,), jnp.float32) * s,
        "bhh": jax.random.normal(ks[7], (4 * HIDDEN_SIZE,), jnp.float32) * s,
        "wfc1": jax.random.normal(ks[8], (16, HIDDEN_SIZE), jnp.float32) * s,
        "bfc1": jnp.zeros((16,), jnp.float32),
        "wfc2": jax.random.normal(ks[9], (2, 16), jnp.float32) * s,
        "bfc2": jnp.zeros((2,), jnp.float32),
    }


def prepare_params(raw):
    """Fold conv im2col, pooled-column selection and torch's channel-major
    flatten into host-precomputed structured matrices (one-time cost)."""
    L, C1, C2, H = INPUT_SIZE, N_FILTERS, F2, HIDDEN_SIZE

    # K1[m, p*C1 + c] = w1[c, 0, m - p + 2] on the band 0 <= m-p+2 < 5.
    w1_2d = raw["w1"][:, 0, :]                              # (C1, 5)
    m = jnp.arange(L)[:, None, None]
    p = jnp.arange(L)[None, :, None]
    c = jnp.arange(C1)[None, None, :]
    j = m - p + 2
    k1 = jnp.where((j >= 0) & (j < 5), w1_2d[c, jnp.clip(j, 0, 4)], 0.0)
    k1 = k1.reshape(L, L * C1)
    b1 = jnp.tile(raw["b1"], L).reshape(1, L * C1)

    # K2[p*C1 + c1, p2*C2 + c2] = w2[c2, c1, p//2 - p2 + 2] for even p on the
    # band, 0 otherwise (zero rows drop the invalid pooled columns).
    rp = jnp.arange(L)[:, None, None, None]
    rc1 = jnp.arange(C1)[None, :, None, None]
    cp2 = jnp.arange(L2)[None, None, :, None]
    cc2 = jnp.arange(C2)[None, None, None, :]
    j2 = rp // 2 - cp2 + 2
    valid2 = (rp % 2 == 0) & (j2 >= 0) & (j2 < 5)
    k2 = jnp.where(valid2, raw["w2"][cc2, rc1, jnp.clip(j2, 0, 4)], 0.0)
    k2 = k2.reshape(L * C1, L2 * C2)
    b2 = jnp.tile(raw["b2"], L2).reshape(1, L2 * C2)

    # Wih_eff[p2*C2 + c2, :] = W_ih^T[c2*L4 + p2//2, :] for even p2, else 0
    # (torch's (N, C, L) -> (N, C*L) channel-major flatten folded in).
    wih_t = raw["wih"].T                                    # (LSTM_IN, 4H)
    rp2 = jnp.arange(L2)[:, None, None]
    rc2 = jnp.arange(C2)[None, :, None]
    gc = jnp.arange(4 * H)[None, None, :]
    feat_idx = rc2 * L4 + rp2 // 2
    wih_eff = jnp.where(rp2 % 2 == 0, wih_t[feat_idx, gc], 0.0)
    wih_eff = wih_eff.reshape(L2 * C2, 4 * H)

    return {
        "k1": k1, "b1": b1, "k2": k2, "b2": b2,
        "wih_eff": wih_eff,
        "whh_t": raw["whh"].T,                              # (H, 4H)
        "b_lstm": (raw["bih"] + raw["bhh"]).reshape(1, 4 * H),
        "wfc1": raw["wfc1"].T, "bfc1": raw["bfc1"].reshape(1, 16),
        "wfc2": raw["wfc2"].T, "bfc2": raw["bfc2"].reshape(1, 2),
    }


# ----------------------------------------------------------------------------
# Pure-JAX reference using the original PyTorch parameter layout.
# ----------------------------------------------------------------------------
def _conv1d_same(x_ncl, w, b):
    """PyTorch Conv1d(kernel=5, stride=1, padding=2): x (N, Cin, L)."""
    n, cin, l = x_ncl.shape
    xp = jnp.pad(x_ncl, ((0, 0), (0, 0), (2, 2)))
    cols = jnp.stack([xp[:, :, j:j + l] for j in range(5)], axis=-1)  # (N,Cin,L,5)
    return jnp.einsum("ncpj,ocj->nop", cols, w) + b[None, :, None]


def reference_forward(x, raw):
    b, t, l = x.shape
    n = b * t
    h1 = jnp.maximum(_conv1d_same(x.reshape(n, 1, l), raw["w1"], raw["b1"]), 0.0)
    h1 = h1.reshape(n, N_FILTERS, l // 2, 2).max(axis=-1)
    h2 = jnp.maximum(_conv1d_same(h1, raw["w2"], raw["b2"]), 0.0)
    h2 = h2.reshape(n, F2, l // 4, 2).max(axis=-1)
    feat = h2.reshape(b, t, LSTM_IN)            # torch x.view(batch, time, -1)
    wih_t, whh_t = raw["wih"].T, raw["whh"].T
    bias = raw["bih"] + raw["bhh"]
    h = jnp.zeros((b, HIDDEN_SIZE), jnp.float32)
    c = jnp.zeros((b, HIDDEN_SIZE), jnp.float32)
    H = HIDDEN_SIZE
    for step in range(t):
        g = feat[:, step, :] @ wih_t + h @ whh_t + bias
        i_g = jax.nn.sigmoid(g[:, :H])
        f_g = jax.nn.sigmoid(g[:, H:2 * H])
        g_g = jnp.tanh(g[:, 2 * H:3 * H])
        o_g = jax.nn.sigmoid(g[:, 3 * H:])
        c = f_g * c + i_g * g_g
        h = o_g * jnp.tanh(c)
    z = jnp.maximum(h @ raw["wfc1"].T + raw["bfc1"], 0.0)
    return z @ raw["wfc2"].T + raw["bfc2"]


if __name__ == "__main__":
    key = jax.random.PRNGKey(0)
    kx, kp = jax.random.split(key)
    x = jax.random.normal(kx, (BATCH, TIME_STEP, INPUT_SIZE), jnp.float32)
    raw = init_raw_params(kp)
    params = prepare_params(raw)

    out = jax.jit(cnn_lstm_forward)(x, params)
    out = jax.block_until_ready(out)
    assert out.shape == (BATCH, 2) and out.dtype == jnp.float32

    with jax.default_matmul_precision("highest"):
        ref = jax.block_until_ready(reference_forward(x, raw))
    assert jnp.allclose(out, ref, rtol=2e-2, atol=3e-3), (out, ref)

    print("KERNEL_OK")
</pallas_src>

<mosaic_0001>
module attributes {stable_mosaic.version = 11 : i64} {
  func.func @_cnn_lstm_kernel(%arg0: memref<16x16xf32, #tpu.memory_space<vmem>>, %arg1: memref<16x512xf32, #tpu.memory_space<vmem>>, %arg2: memref<1x512xf32, #tpu.memory_space<vmem>>, %arg3: memref<512x128xf32, #tpu.memory_space<vmem>>, %arg4: memref<1x128xf32, #tpu.memory_space<vmem>>, %arg5: memref<128x128xf32, #tpu.memory_space<vmem>>, %arg6: memref<32x128xf32, #tpu.memory_space<vmem>>, %arg7: memref<1x128xf32, #tpu.memory_space<vmem>>, %arg8: memref<32x16xf32, #tpu.memory_space<vmem>>, %arg9: memref<1x16xf32, #tpu.memory_space<vmem>>, %arg10: memref<16x2xf32, #tpu.memory_space<vmem>>, %arg11: memref<1x2xf32, #tpu.memory_space<vmem>>, %arg12: memref<2x2xf32, #tpu.memory_space<vmem>>) attributes {dimension_semantics = [], scalar_prefetch = 0 : i64, scratch_operands = 0 : i64, tpu.core_type = #tpu.core_type<tc>} {
    %c0 = arith.constant 0 : index
    %c0_0 = arith.constant 0 : index
    %0 = vector.load %arg0[%c0, %c0_0] : memref<16x16xf32, #tpu.memory_space<vmem>>, vector<16x16xf32>
    %c0_1 = arith.constant 0 : index
    %c0_2 = arith.constant 0 : index
    %1 = vector.load %arg1[%c0_1, %c0_2] : memref<16x512xf32, #tpu.memory_space<vmem>>, vector<16x512xf32>
    %cst = arith.constant dense<0.000000e+00> : vector<16x512xf32>
    %2 = tpu.matmul %0, %1, %cst {dimension_numbers = #tpu.dot_dimension_numbers<[1], [0], [0], [1], [0, 0, 1, 1], [], []>} : vector<16x16xf32>, vector<16x512xf32>, vector<16x512xf32> -> vector<16x512xf32>
    %c0_3 = arith.constant 0 : index
    %c0_4 = arith.constant 0 : index
    %3 = vector.load %arg2[%c0_3, %c0_4] : memref<1x512xf32, #tpu.memory_space<vmem>>, vector<1x512xf32>
    %4 = vector.broadcast %3 : vector<1x512xf32> to vector<16x512xf32>
    %5 = arith.addf %2, %4 : vector<16x512xf32>
    %cst_5 = arith.constant 0.000000e+00 : f32
    %6 = vector.broadcast %cst_5 : f32 to vector<16x512xf32>
    %7 = arith.maximumf %5, %6 : vector<16x512xf32>
    %8 = vector.extract_strided_slice %7 {offsets = [0, 32], sizes = [16, 480], strides = [1, 1]} : vector<16x512xf32> to vector<16x480xf32>
    %cst_6 = arith.constant 0.000000e+00 : f32
    %9 = vector.broadcast %cst_6 : f32 to vector<16x32xf32>
    %10 = tpu.concatenate %8, %9 in 1 : vector<16x480xf32>, vector<16x32xf32> -> vector<16x512xf32>
    %11 = arith.maximumf %7, %10 : vector<16x512xf32>
    %c0_7 = arith.constant 0 : index
    %c0_8 = arith.constant 0 : index
    %12 = vector.load %arg3[%c0_7, %c0_8] : memref<512x128xf32, #tpu.memory_space<vmem>>, vector<512x128xf32>
    %cst_9 = arith.constant dense<0.000000e+00> : vector<16x128xf32>
    %13 = tpu.matmul %11, %12, %cst_9 {dimension_numbers = #tpu.dot_dimension_numbers<[1], [0], [0], [1], [0, 0, 1, 1], [], []>} : vector<16x512xf32>, vector<512x128xf32>, vector<16x128xf32> -> vector<16x128xf32>
    %c0_10 = arith.constant 0 : index
    %c0_11 = arith.constant 0 : index
    %14 = vector.load %arg4[%c0_10, %c0_11] : memref<1x128xf32, #tpu.memory_space<vmem>>, vector<1x128xf32>
    %15 = vector.broadcast %14 : vector<1x128xf32> to vector<16x128xf32>
    %16 = arith.addf %13, %15 : vector<16x128xf32>
    %cst_12 = arith.constant 0.000000e+00 : f32
    %17 = vector.broadcast %cst_12 : f32 to vector<16x128xf32>
    %18 = arith.maximumf %16, %17 : vector<16x128xf32>
    %19 = vector.extract_strided_slice %18 {offsets = [0, 16], sizes = [16, 112], strides = [1, 1]} : vector<16x128xf32> to vector<16x112xf32>
    %cst_13 = arith.constant 0.000000e+00 : f32
    %20 = vector.broadcast %cst_13 : f32 to vector<16x16xf32>
    %21 = tpu.concatenate %19, %20 in 1 : vector<16x112xf32>, vector<16x16xf32> -> vector<16x128xf32>
    %22 = arith.maximumf %18, %21 : vector<16x128xf32>
    %c0_14 = arith.constant 0 : index
    %c0_15 = arith.constant 0 : index
    %23 = vector.load %arg5[%c0_14, %c0_15] : memref<128x128xf32, #tpu.memory_space<vmem>>, vector<128x128xf32>
    %cst_16 = arith.constant dense<0.000000e+00> : vector<16x128xf32>
    %24 = tpu.matmul %22, %23, %cst_16 {dimension_numbers = #tpu.dot_dimension_numbers<[1], [0], [0], [1], [0, 0, 1, 1], [], []>} : vector<16x128xf32>, vector<128x128xf32>, vector<16x128xf32> -> vector<16x128xf32>
    %c0_17 = arith.constant 0 : index
    %c0_18 = arith.constant 0 : index
    %25 = vector.load %arg7[%c0_17, %c0_18] : memref<1x128xf32, #tpu.memory_space<vmem>>, vector<1x128xf32>
    %26 = vector.broadcast %25 : vector<1x128xf32> to vector<16x128xf32>
    %27 = arith.addf %24, %26 : vector<16x128xf32>
    %c0_19 = arith.constant 0 : index
    %c0_20 = arith.constant 0 : index
    %28 = vector.load %arg6[%c0_19, %c0_20] : memref<32x128xf32, #tpu.memory_space<vmem>>, vector<32x128xf32>
    %cst_21 = arith.constant 0.000000e+00 : f32
    %29 = vector.broadcast %cst_21 : f32 to vector<2x32xf32>
    %cst_22 = arith.constant 0.000000e+00 : f32
    %30 = vector.broadcast %cst_22 : f32 to vector<2x32xf32>
    %31 = vector.extract_strided_slice %27 {offsets = [0, 0], sizes = [2, 128], strides = [1, 1]} : vector<16x128xf32> to vector<2x128xf32>
    %cst_23 = arith.constant dense<0.000000e+00> : vector<2x128xf32>
    %32 = tpu.matmul %29, %28, %cst_23 {dimension_numbers = #tpu.dot_dimension_numbers<[1], [0], [0], [1], [0, 0, 1, 1], [], []>} : vector<2x32xf32>, vector<32x128xf32>, vector<2x128xf32> -> vector<2x128xf32>
    %33 = arith.addf %31, %32 : vector<2x128xf32>
    %34 = arith.negf %33 : vector<2x128xf32>
    %35 = math.exp %34 : vector<2x128xf32>
    %cst_24 = arith.constant 1.000000e+00 : f32
    %36 = vector.broadcast %cst_24 : f32 to vector<2x128xf32>
    %37 = arith.addf %36, %35 : vector<2x128xf32>
    %38 = arith.divf %36, %37 : vector<2x128xf32>
    %39 = math.tanh %33 : vector<2x128xf32>
    %40 = vector.extract_strided_slice %38 {offsets = [0, 0], sizes = [2, 32], strides = [1, 1]} : vector<2x128xf32> to vector<2x32xf32>
    %41 = vector.extract_strided_slice %38 {offsets = [0, 32], sizes = [2, 32], strides = [1, 1]} : vector<2x128xf32> to vector<2x32xf32>
    %42 = vector.extract_strided_slice %39 {offsets = [0, 64], sizes = [2, 32], strides = [1, 1]} : vector<2x128xf32> to vector<2x32xf32>
    %43 = vector.extract_strided_slice %38 {offsets = [0, 96], sizes = [2, 32], strides = [1, 1]} : vector<2x128xf32> to vector<2x32xf32>
    %44 = arith.mulf %41, %30 : vector<2x32xf32>
    %45 = arith.mulf %40, %42 : vector<2x32xf32>
    %46 = arith.addf %44, %45 : vector<2x32xf32>
    %47 = math.tanh %46 : vector<2x32xf32>
    %48 = arith.mulf %43, %47 : vector<2x32xf32>
    %49 = vector.extract_strided_slice %27 {offsets = [2, 0], sizes = [2, 128], strides = [1, 1]} : vector<16x128xf32> to vector<2x128xf32>
    %cst_25 = arith.constant dense<0.000000e+00> : vector<2x128xf32>
    %50 = tpu.matmul %48, %28, %cst_25 {dimension_numbers = #tpu.dot_dimension_numbers<[1], [0], [0], [1], [0, 0, 1, 1], [], []>} : vector<2x32xf32>, vector<32x128xf32>, vector<2x128xf32> -> vector<2x128xf32>
    %51 = arith.addf %49, %50 : vector<2x128xf32>
    %52 = arith.negf %51 : vector<2x128xf32>
    %53 = math.exp %52 : vector<2x128xf32>
    %cst_26 = arith.constant 1.000000e+00 : f32
    %54 = vector.broadcast %cst_26 : f32 to vector<2x128xf32>
    %55 = arith.addf %54, %53 : vector<2x128xf32>
    %56 = arith.divf %54, %55 : vector<2x128xf32>
    %57 = math.tanh %51 : vector<2x128xf32>
    %58 = vector.extract_strided_slice %56 {offsets = [0, 0], sizes = [2, 32], strides = [1, 1]} : vector<2x128xf32> to vector<2x32xf32>
    %59 = vector.extract_strided_slice %56 {offsets = [0, 32], sizes = [2, 32], strides = [1, 1]} : vector<2x128xf32> to vector<2x32xf32>
    %60 = vector.extract_strided_slice %57 {offsets = [0, 64], sizes = [2, 32], strides = [1, 1]} : vector<2x128xf32> to vector<2x32xf32>
    %61 = vector.extract_strided_slice %56 {offsets = [0, 96], sizes = [2, 32], strides = [1, 1]} : vector<2x128xf32> to vector<2x32xf32>
    %62 = arith.mulf %59, %46 : vector<2x32xf32>
    %63 = arith.mulf %58, %60 : vector<2x32xf32>
    %64 = arith.addf %62, %63 : vector<2x32xf32>
    %65 = math.tanh %64 : vector<2x32xf32>
    %66 = arith.mulf %61, %65 : vector<2x32xf32>
    %67 = vector.extract_strided_slice %27 {offsets = [4, 0], sizes = [2, 128], strides = [1, 1]} : vector<16x128xf32> to vector<2x128xf32>
    %cst_27 = arith.constant dense<0.000000e+00> : vector<2x128xf32>
    %68 = tpu.matmul %66, %28, %cst_27 {dimension_numbers = #tpu.dot_dimension_numbers<[1], [0], [0], [1], [0, 0, 1, 1], [], []>} : vector<2x32xf32>, vector<32x128xf32>, vector<2x128xf32> -> vector<2x128xf32>
    %69 = arith.addf %67, %68 : vector<2x128xf32>
    %70 = arith.negf %69 : vector<2x128xf32>
    %71 = math.exp %70 : vector<2x128xf32>
    %cst_28 = arith.constant 1.000000e+00 : f32
    %72 = vector.broadcast %cst_28 : f32 to vector<2x128xf32>
    %73 = arith.addf %72, %71 : vector<2x128xf32>
    %74 = arith.divf %72, %73 : vector<2x128xf32>
    %75 = math.tanh %69 : vector<2x128xf32>
    %76 = vector.extract_strided_slice %74 {offsets = [0, 0], sizes = [2, 32], strides = [1, 1]} : vector<2x128xf32> to vector<2x32xf32>
    %77 = vector.extract_strided_slice %74 {offsets = [0, 32], sizes = [2, 32], strides = [1, 1]} : vector<2x128xf32> to vector<2x32xf32>
    %78 = vector.extract_strided_slice %75 {offsets = [0, 64], sizes = [2, 32], strides = [1, 1]} : vector<2x128xf32> to vector<2x32xf32>
    %79 = vector.extract_strided_slice %74 {offsets = [0, 96], sizes = [2, 32], strides = [1, 1]} : vector<2x128xf32> to vector<2x32xf32>
    %80 = arith.mulf %77, %64 : vector<2x32xf32>
    %81 = arith.mulf %76, %78 : vector<2x32xf32>
    %82 = arith.addf %80, %81 : vector<2x32xf32>
    %83 = math.tanh %82 : vector<2x32xf32>
    %84 = arith.mulf %79, %83 : vector<2x32xf32>
    %85 = vector.extract_strided_slice %27 {offsets = [6, 0], sizes = [2, 128], strides = [1, 1]} : vector<16x128xf32> to vector<2x128xf32>
    %cst_29 = arith.constant dense<0.000000e+00> : vector<2x128xf32>
    %86 = tpu.matmul %84, %28, %cst_29 {dimension_numbers = #tpu.dot_dimension_numbers<[1], [0], [0], [1], [0, 0, 1, 1], [], []>} : vector<2x32xf32>, vector<32x128xf32>, vector<2x128xf32> -> vector<2x128xf32>
    %87 = arith.addf %85, %86 : vector<2x128xf32>
    %88 = arith.negf %87 : vector<2x128xf32>
    %89 = math.exp %88 : vector<2x128xf32>
    %cst_30 = arith.constant 1.000000e+00 : f32
    %90 = vector.broadcast %cst_30 : f32 to vector<2x128xf32>
    %91 = arith.addf %90, %89 : vector<2x128xf32>
    %92 = arith.divf %90, %91 : vector<2x128xf32>
    %93 = math.tanh %87 : vector<2x128xf32>
    %94 = vector.extract_strided_slice %92 {offsets = [0, 0], sizes = [2, 32], strides = [1, 1]} : vector<2x128xf32> to vector<2x32xf32>
    %95 = vector.extract_strided_slice %92 {offsets = [0, 32], sizes = [2, 32], strides = [1, 1]} : vector<2x128xf32> to vector<2x32xf32>
    %96 = vector.extract_strided_slice %93 {offsets = [0, 64], sizes = [2, 32], strides = [1, 1]} : vector<2x128xf32> to vector<2x32xf32>
    %97 = vector.extract_strided_slice %92 {offsets = [0, 96], sizes = [2, 32], strides = [1, 1]} : vector<2x128xf32> to vector<2x32xf32>
    %98 = arith.mulf %95, %82 : vector<2x32xf32>
    %99 = arith.mulf %94, %96 : vector<2x32xf32>
    %100 = arith.addf %98, %99 : vector<2x32xf32>
    %101 = math.tanh %100 : vector<2x32xf32>
    %102 = arith.mulf %97, %101 : vector<2x32xf32>
    %103 = vector.extract_strided_slice %27 {offsets = [8, 0], sizes = [2, 128], strides = [1, 1]} : vector<16x128xf32> to vector<2x128xf32>
    %cst_31 = arith.constant dense<0.000000e+00> : vector<2x128xf32>
    %104 = tpu.matmul %102, %28, %cst_31 {dimension_numbers = #tpu.dot_dimension_numbers<[1], [0], [0], [1], [0, 0, 1, 1], [], []>} : vector<2x32xf32>, vector<32x128xf32>, vector<2x128xf32> -> vector<2x128xf32>
    %105 = arith.addf %103, %104 : vector<2x128xf32>
    %106 = arith.negf %105 : vector<2x128xf32>
    %107 = math.exp %106 : vector<2x128xf32>
    %cst_32 = arith.constant 1.000000e+00 : f32
    %108 = vector.broadcast %cst_32 : f32 to vector<2x128xf32>
    %109 = arith.addf %108, %107 : vector<2x128xf32>
    %110 = arith.divf %108, %109 : vector<2x128xf32>
    %111 = math.tanh %105 : vector<2x128xf32>
    %112 = vector.extract_strided_slice %110 {offsets = [0, 0], sizes = [2, 32], strides = [1, 1]} : vector<2x128xf32> to vector<2x32xf32>
    %113 = vector.extract_strided_slice %110 {offsets = [0, 32], sizes = [2, 32], strides = [1, 1]} : vector<2x128xf32> to vector<2x32xf32>
    %114 = vector.extract_strided_slice %111 {offsets = [0, 64], sizes = [2, 32], strides = [1, 1]} : vector<2x128xf32> to vector<2x32xf32>
    %115 = vector.extract_strided_slice %110 {offsets = [0, 96], sizes = [2, 32], strides = [1, 1]} : vector<2x128xf32> to vector<2x32xf32>
    %116 = arith.mulf %113, %100 : vector<2x32xf32>
    %117 = arith.mulf %112, %114 : vector<2x32xf32>
    %118 = arith.addf %116, %117 : vector<2x32xf32>
    %119 = math.tanh %118 : vector<2x32xf32>
    %120 = arith.mulf %115, %119 : vector<2x32xf32>
    %121 = vector.extract_strided_slice %27 {offsets = [10, 0], sizes = [2, 128], strides = [1, 1]} : vector<16x128xf32> to vector<2x128xf32>
    %cst_33 = arith.constant dense<0.000000e+00> : vector<2x128xf32>
    %122 = tpu.matmul %120, %28, %cst_33 {dimension_numbers = #tpu.dot_dimension_numbers<[1], [0], [0], [1], [0, 0, 1, 1], [], []>} : vector<2x32xf32>, vector<32x128xf32>, vector<2x128xf32> -> vector<2x128xf32>
    %123 = arith.addf %121, %122 : vector<2x128xf32>
    %124 = arith.negf %123 : vector<2x128xf32>
    %125 = math.exp %124 : vector<2x128xf32>
    %cst_34 = arith.constant 1.000000e+00 : f32
    %126 = vector.broadcast %cst_34 : f32 to vector<2x128xf32>
    %127 = arith.addf %126, %125 : vector<2x128xf32>
    %128 = arith.divf %126, %127 : vector<2x128xf32>
    %129 = math.tanh %123 : vector<2x128xf32>
    %130 = vector.extract_strided_slice %128 {offsets = [0, 0], sizes = [2, 32], strides = [1, 1]} : vector<2x128xf32> to vector<2x32xf32>
    %131 = vector.extract_strided_slice %128 {offsets = [0, 32], sizes = [2, 32], strides = [1, 1]} : vector<2x128xf32> to vector<2x32xf32>
    %132 = vector.extract_strided_slice %129 {offsets = [0, 64], sizes = [2, 32], strides = [1, 1]} : vector<2x128xf32> to vector<2x32xf32>
    %133 = vector.extract_strided_slice %128 {offsets = [0, 96], sizes = [2, 32], strides = [1, 1]} : vector<2x128xf32> to vector<2x32xf32>
    %134 = arith.mulf %131, %118 : vector<2x32xf32>
    %135 = arith.mulf %130, %132 : vector<2x32xf32>
    %136 = arith.addf %134, %135 : vector<2x32xf32>
    %137 = math.tanh %136 : vector<2x32xf32>
    %138 = arith.mulf %133, %137 : vector<2x32xf32>
    %139 = vector.extract_strided_slice %27 {offsets = [12, 0], sizes = [2, 128], strides = [1, 1]} : vector<16x128xf32> to vector<2x128xf32>
    %cst_35 = arith.constant dense<0.000000e+00> : vector<2x128xf32>
    %140 = tpu.matmul %138, %28, %cst_35 {dimension_numbers = #tpu.dot_dimension_numbers<[1], [0], [0], [1], [0, 0, 1, 1], [], []>} : vector<2x32xf32>, vector<32x128xf32>, vector<2x128xf32> -> vector<2x128xf32>
    %141 = arith.addf %139, %140 : vector<2x128xf32>
    %142 = arith.negf %141 : vector<2x128xf32>
    %143 = math.exp %142 : vector<2x128xf32>
    %cst_36 = arith.constant 1.000000e+00 : f32
    %144 = vector.broadcast %cst_36 : f32 to vector<2x128xf32>
    %145 = arith.addf %144, %143 : vector<2x128xf32>
    %146 = arith.divf %144, %145 : vector<2x128xf32>
    %147 = math.tanh %141 : vector<2x128xf32>
    %148 = vector.extract_strided_slice %146 {offsets = [0, 0], sizes = [2, 32], strides = [1, 1]} : vector<2x128xf32> to vector<2x32xf32>
    %149 = vector.extract_strided_slice %146 {offsets = [0, 32], sizes = [2, 32], strides = [1, 1]} : vector<2x128xf32> to vector<2x32xf32>
    %150 = vector.extract_strided_slice %147 {offsets = [0, 64], sizes = [2, 32], strides = [1, 1]} : vector<2x128xf32> to vector<2x32xf32>
    %151 = vector.extract_strided_slice %146 {offsets = [0, 96], sizes = [2, 32], strides = [1, 1]} : vector<2x128xf32> to vector<2x32xf32>
    %152 = arith.mulf %149, %136 : vector<2x32xf32>
    %153 = arith.mulf %148, %150 : vector<2x32xf32>
    %154 = arith.addf %152, %153 : vector<2x32xf32>
    %155 = math.tanh %154 : vector<2x32xf32>
    %156 = arith.mulf %151, %155 : vector<2x32xf32>
    %157 = vector.extract_strided_slice %27 {offsets = [14, 0], sizes = [2, 128], strides = [1, 1]} : vector<16x128xf32> to vector<2x128xf32>
    %cst_37 = arith.constant dense<0.000000e+00> : vector<2x128xf32>
    %158 = tpu.matmul %156, %28, %cst_37 {dimension_numbers = #tpu.dot_dimension_numbers<[1], [0], [0], [1], [0, 0, 1, 1], [], []>} : vector<2x32xf32>, vector<32x128xf32>, vector<2x128xf32> -> vector<2x128xf32>
    %159 = arith.addf %157, %158 : vector<2x128xf32>
    %160 = arith.negf %159 : vector<2x128xf32>
    %161 = math.exp %160 : vector<2x128xf32>
    %cst_38 = arith.constant 1.000000e+00 : f32
    %162 = vector.broadcast %cst_38 : f32 to vector<2x128xf32>
    %163 = arith.addf %162, %161 : vector<2x128xf32>
    %164 = arith.divf %162, %163 : vector<2x128xf32>
    %165 = math.tanh %159 : vector<2x128xf32>
    %166 = vector.extract_strided_slice %164 {offsets = [0, 0], sizes = [2, 32], strides = [1, 1]} : vector<2x128xf32> to vector<2x32xf32>
    %167 = vector.extract_strided_slice %164 {offsets = [0, 32], sizes = [2, 32], strides = [1, 1]} : vector<2x128xf32> to vector<2x32xf32>
    %168 = vector.extract_strided_slice %165 {offsets = [0, 64], sizes = [2, 32], strides = [1, 1]} : vector<2x128xf32> to vector<2x32xf32>
    %169 = vector.extract_strided_slice %164 {offsets = [0, 96], sizes = [2, 32], strides = [1, 1]} : vector<2x128xf32> to vector<2x32xf32>
    %170 = arith.mulf %167, %154 : vector<2x32xf32>
    %171 = arith.mulf %166, %168 : vector<2x32xf32>
    %172 = arith.addf %170, %171 : vector<2x32xf32>
    %173 = math.tanh %172 : vector<2x32xf32>
    %174 = arith.mulf %169, %173 : vector<2x32xf32>
    %c0_39 = arith.constant 0 : index
    %c0_40 = arith.constant 0 : index
    %175 = vector.load %arg8[%c0_39, %c0_40] : memref<32x16xf32, #tpu.memory_space<vmem>>, vector<32x16xf32>
    %cst_41 = arith.constant dense<0.000000e+00> : vector<2x16xf32>
    %176 = tpu.matmul %174, %175, %cst_41 {dimension_numbers = #tpu.dot_dimension_numbers<[1], [0], [0], [1], [0, 0, 1, 1], [], []>} : vector<2x32xf32>, vector<32x16xf32>, vector<2x16xf32> -> vector<2x16xf32>
    %c0_42 = arith.constant 0 : index
    %c0_43 = arith.constant 0 : index
    %177 = vector.load %arg9[%c0_42, %c0_43] : memref<1x16xf32, #tpu.memory_space<vmem>>, vector<1x16xf32>
    %178 = vector.broadcast %177 : vector<1x16xf32> to vector<2x16xf32>
    %179 = arith.addf %176, %178 : vector<2x16xf32>
    %cst_44 = arith.constant 0.000000e+00 : f32
    %180 = vector.broadcast %cst_44 : f32 to vector<2x16xf32>
    %181 = arith.maximumf %179, %180 : vector<2x16xf32>
    %c0_45 = arith.constant 0 : index
    %c0_46 = arith.constant 0 : index
    %182 = vector.load %arg10[%c0_45, %c0_46] : memref<16x2xf32, #tpu.memory_space<vmem>>, vector<16x2xf32>
    %cst_47 = arith.constant dense<0.000000e+00> : vector<2x2xf32>
    %183 = tpu.matmul %181, %182, %cst_47 {dimension_numbers = #tpu.dot_dimension_numbers<[1], [0], [0], [1], [0, 0, 1, 1], [], []>} : vector<2x16xf32>, vector<16x2xf32>, vector<2x2xf32> -> vector<2x2xf32>
    %c0_48 = arith.constant 0 : index
    %c0_49 = arith.constant 0 : index
    %184 = vector.load %arg11[%c0_48, %c0_49] : memref<1x2xf32, #tpu.memory_space<vmem>>, vector<1x2xf32>
    %185 = vector.broadcast %184 : vector<1x2xf32> to vector<2x2xf32>
    %186 = arith.addf %183, %185 : vector<2x2xf32>
    %c0_50 = arith.constant 0 : index
    %c0_51 = arith.constant 0 : index
    %187 = vector.load %arg12[%c0_50, %c0_51] : memref<2x2xf32, #tpu.memory_space<vmem>>, vector<2x2xf32>
    tpu.vector_store %arg12[%c0_50, %c0_51], %186 {strides = array<i32>} : memref<2x2xf32, #tpu.memory_space<vmem>>, vector<2x2xf32>,
    return
  }
}

</mosaic_0001>

<llo_original>
// kernel: cnn_lstm_forward.1
$region0: #{cnn_lstm_forward.1}
  #allocation0 [shape = 'u32[]', space=smem, size = 0x4, offset = 0x4, fixed_abs, tag = 'smem constant byte address 0x4 - core index']
  #allocation1 [shape = 'u32[144,128]{1,0:T(1,128)}', space=vmem, size = 0x12000, scoped, tag = 'internal scratch']
  %s0 = inlined_call_operand.vmem [shape: f32[16,16], index: 0, kind: input, shape index: {}]
  %s1 = inlined_call_operand.hbm [shape: f32[16,512], index: 1, kind: input, shape index: {}]
  %s2 = inlined_call_operand.vmem [shape: f32[1,512], index: 2, kind: input, shape index: {}]
  %s3 = inlined_call_operand.hbm [shape: f32[512,128], index: 3, kind: input, shape index: {}]
  %s4 = inlined_call_operand.vmem [shape: f32[1,128], index: 4, kind: input, shape index: {}]
  %s5 = inlined_call_operand.vmem [shape: f32[128,128], index: 5, kind: input, shape index: {}]
  %s6 = inlined_call_operand.hbm [shape: f32[32,128], index: 6, kind: input, shape index: {}]
  %s7 = inlined_call_operand.vmem [shape: f32[1,128], index: 7, kind: input, shape index: {}]
  %s8 = inlined_call_operand.vmem [shape: f32[32,16], index: 8, kind: input, shape index: {}]
  %s9 = inlined_call_operand.vmem [shape: f32[1,16], index: 9, kind: input, shape index: {}]
  %s10 = inlined_call_operand.vmem [shape: f32[16,2], index: 10, kind: input, shape index: {}]
  %s11 = inlined_call_operand.vmem [shape: f32[1,2], index: 11, kind: input, shape index: {}]
  %s12 = inlined_call_operand.hbm [shape: f32[2,2], index: 12, kind: output, shape index: {}]
  %s13 = sld [smem:[#allocation0]]
  $region70: #{cnn_lstm_forward.1} parent=0
    _
  %s15 = ssub.s32 1, %s13
  %s16 = scalar_select 0, %s15, %s13
  $region1: #{cnn_lstm_forward.1} parent=0
    #allocation2 [shape = 'u8[32768]{0}', space=vmem, size = 0x8000, scoped, tag = 'input window, operand 1, single buffered']
    #allocation3 [shape = 's32[1]{0}', space=sflag, size = 0x4, scoped, tag = 'scoped memory for cnn_lstm_forward.1']
    #allocation4 [shape = 's32[1]{0}', space=sflag, size = 0x4, scoped, tag = 'scoped memory for cnn_lstm_forward.1']
    #allocation5 [shape = 'u8[262144]{0}', space=vmem, size = 0x40000, scoped, tag = 'input window, operand 3, single buffered']
    #allocation6 [shape = 's32[1]{0}', space=sflag, size = 0x4, scoped, tag = 'scoped memory for cnn_lstm_forward.1']
    #allocation7 [shape = 'u8[16384]{0}', space=vmem, size = 0x4000, scoped, tag = 'input window, operand 6, single buffered']
    #allocation8 [shape = 'u8[1024]{0}', space=vmem, size = 0x400, scoped, tag = 'output window, operand 0, single buffered']
    %17 = vsyncpa [#allocation3], 0
    %18 = vsyncpa [#allocation6], 0
    %19 = vsyncpa [#allocation4], 0
    // Predicated region
    $region2: #{cnn_lstm_forward.1} parent=1 // pred_check
      _
    $region3: #{cnn_lstm_forward.1} parent=1 // pred_check_branch
      %21 = sbr.rel (0) target = $region5
    $region4: #{cnn_lstm_forward.1} parent=1 // pred_region
      _
    $region5: #{cnn_lstm_forward.1} parent=1 // pred_fallthru
      _
    // Predicated region
    $region6: #{cnn_lstm_forward.1} parent=1 // pred_check
      _
    $region7: #{cnn_lstm_forward.1} parent=1 // pred_check_branch
      %23 = sbr.rel (0) target = $region9
    $region8: #{cnn_lstm_forward.1} parent=1 // pred_region
      %s25 = ssub.s32 1024, 1024
      %26 = vsyncadd [#allocation3], %s25
      %s27 = sshll.u32 [#allocation2], 4
      %s28 = int_to_ptr.vmem [resolvable:$true] %s27
      %33 = dma.hbm_to_vmem [thread:$0]  %s1, 1024, %s28, [#allocation3], 512, 512, 32
    $region9: #{cnn_lstm_forward.1} parent=1 // pred_fallthru
      _
    // Predicated region
    $region10: #{cnn_lstm_forward.1} parent=1 // pred_check
      _
    $region11: #{cnn_lstm_forward.1} parent=1 // pred_check_branch
      %35 = sbr.rel (0) target = $region13
    $region12: #{cnn_lstm_forward.1} parent=1 // pred_region
      _
    $region13: #{cnn_lstm_forward.1} parent=1 // pred_fallthru
      _
    // Predicated region
    $region14: #{cnn_lstm_forward.1} parent=1 // pred_check
      _
    $region15: #{cnn_lstm_forward.1} parent=1 // pred_check_branch
      %37 = sbr.rel (0) target = $region17
    $region16: #{cnn_lstm_forward.1} parent=1 // pred_region
      %s39 = ssub.s32 8192, 8192
      %40 = vsyncadd [#allocation6], %s39
      %s41 = sshll.u32 [#allocation5], 4
      %s42 = int_to_ptr.vmem [resolvable:$true] %s41
      %47 = dma.hbm_to_vmem [thread:$0]  %s3, 8192, %s42, [#allocation6], 128, 128, 8
    $region17: #{cnn_lstm_forward.1} parent=1 // pred_fallthru
      _
    // Predicated region
    $region18: #{cnn_lstm_forward.1} parent=1 // pred_check
      _
    $region19: #{cnn_lstm_forward.1} parent=1 // pred_check_branch
      %49 = sbr.rel (0) target = $region21
    $region20: #{cnn_lstm_forward.1} parent=1 // pred_region
      _
    $region21: #{cnn_lstm_forward.1} parent=1 // pred_fallthru
      _
    // Predicated region
    $region22: #{cnn_lstm_forward.1} parent=1 // pred_check
      _
    $region23: #{cnn_lstm_forward.1} parent=1 // pred_check_branch
      %51 = sbr.rel (0) target = $region25
    $region24: #{cnn_lstm_forward.1} parent=1 // pred_region
      _
    $region25: #{cnn_lstm_forward.1} parent=1 // pred_fallthru
      _
    // Predicated region
    $region26: #{cnn_lstm_forward.1} parent=1 // pred_check
      _
    $region27: #{cnn_lstm_forward.1} parent=1 // pred_check_branch
      %53 = sbr.rel (0) target = $region29
    $region28: #{cnn_lstm_forward.1} parent=1 // pred_region
      %s55 = ssub.s32 512, 512
      %56 = vsyncadd [#allocation6], %s55
      %s57 = sshll.u32 [#allocation7], 4
      %s58 = int_to_ptr.vmem [resolvable:$true] %s57
      %63 = dma.hbm_to_vmem [thread:$0]  %s6, 512, %s58, [#allocation6], 128, 128, 8
    $region29: #{cnn_lstm_forward.1} parent=1 // pred_fallthru
      _
    // Predicated region
    $region30: #{cnn_lstm_forward.1} parent=1 // pred_check
      _
    $region31: #{cnn_lstm_forward.1} parent=1 // pred_check_branch
      %65 = sbr.rel (0) target = $region33
    $region32: #{cnn_lstm_forward.1} parent=1 // pred_region
      _
    $region33: #{cnn_lstm_forward.1} parent=1 // pred_fallthru
      _
    // Predicated region
    $region34: #{cnn_lstm_forward.1} parent=1 // pred_check
      _
    $region35: #{cnn_lstm_forward.1} parent=1 // pred_check_branch
      %67 = sbr.rel (0) target = $region37
    $region36: #{cnn_lstm_forward.1} parent=1 // pred_region
      _
    $region37: #{cnn_lstm_forward.1} parent=1 // pred_fallthru
      _
    // Predicated region
    $region38: #{cnn_lstm_forward.1} parent=1 // pred_check
      _
    $region39: #{cnn_lstm_forward.1} parent=1 // pred_check_branch
      %69 = sbr.rel (0) target = $region41
    $region40: #{cnn_lstm_forward.1} parent=1 // pred_region
      _
    $region41: #{cnn_lstm_forward.1} parent=1 // pred_fallthru
      _
    // Predicated region
    $region42: #{cnn_lstm_forward.1} parent=1 // pred_check
      _
    $region43: #{cnn_lstm_forward.1} parent=1 // pred_check_branch
      %71 = sbr.rel (0) target = $region45
    $region44: #{cnn_lstm_forward.1} parent=1 // pred_region
      _
    $region45: #{cnn_lstm_forward.1} parent=1 // pred_fallthru
      _
    // Predicated region
    $region46: #{cnn_lstm_forward.1} parent=1 // pred_check
      _
    $region47: #{cnn_lstm_forward.1} parent=1 // pred_check_branch
      %73 = sbr.rel (0) target = $region49
    $region48: #{cnn_lstm_forward.1} parent=1 // pred_region
      _
    $region49: #{cnn_lstm_forward.1} parent=1 // pred_fallthru
      _
    // Predicated region
    $region50: #{cnn_lstm_forward.1} parent=1 // pred_check
      _
    $region51: #{cnn_lstm_forward.1} parent=1 // pred_check_branch
      %75 = sbr.rel (0) target = $region53
    $region52: #{cnn_lstm_forward.1} parent=1 // pred_region
      %76 = dma.done [#allocation3], 1024
    $region53: #{cnn_lstm_forward.1} parent=1 // pred_fallthru
      _
    // Predicated region
    $region54: #{cnn_lstm_forward.1} parent=1 // pred_check
      _
    $region55: #{cnn_lstm_forward.1} parent=1 // pred_check_branch
      %78 = sbr.rel (0) target = $region57
    $region56: #{cnn_lstm_forward.1} parent=1 // pred_region
      %79 = dma.done [#allocation6], 8192
    $region57: #{cnn_lstm_forward.1} parent=1 // pred_fallthru
      _
    // Predicated region
    $region58: #{cnn_lstm_forward.1} parent=1 // pred_check
      _
    $region59: #{cnn_lstm_forward.1} parent=1 // pred_check_branch
      %81 = sbr.rel (0) target = $region61
    $region60: #{cnn_lstm_forward.1} parent=1 // pred_region
      %82 = dma.done [#allocation6], 512
    $region61: #{cnn_lstm_forward.1} parent=1 // pred_fallthru
      _
    %v83 = vld [vmem:[%s0] sm:$0xff]
    %v84 = vld [vmem:[%s0 + $0x8] sm:$0xff]
    %v85 = vld [vmem:[#allocation2] sm:$0xff]
    %v86 = vld [vmem:[#allocation2 + $0x8] sm:$0xff]
    %v87 = vld [vmem:[#allocation2 + $0x10] sm:$0xff]
    %v88 = vld [vmem:[#allocation2 + $0x18] sm:$0xff]
    %v89 = vld [vmem:[#allocation2 + $0x20] sm:$0xff]
    %v90 = vld [vmem:[#allocation2 + $0x28] sm:$0xff]
    %v91 = vld [vmem:[#allocation2 + $0x30] sm:$0xff]
    %v92 = vld [vmem:[#allocation2 + $0x38] sm:$0xff]
    %v93 = vld [vmem:[%s2] sm:$0xf]
    %v95 = vlaneseq
    %v96 = vshrl.u32 %v95, 7
    %v97 = vsub.s32 0, %v96
    %v98 = vrot.slane %v93, %v97
    %v99 = vlaneseq
    %v100 = vshrl.u32 %v99, 7
    %v101 = vsub.s32 1, %v100
    %v102 = vrot.slane %v93, %v101
    %v103 = vlaneseq
    %v104 = vshrl.u32 %v103, 7
    %v105 = vsub.s32 2, %v104
    %v106 = vrot.slane %v93, %v105
    %v107 = vlaneseq
    %v108 = vshrl.u32 %v107, 7
    %v109 = vsub.s32 3, %v108
    %v110 = vrot.slane %v93, %v109
    %vm115 = vcmask 130048
    %v117 = vsel %vm115, %v83, 0
    %v120 = vsel %vm115, %v84, 0
    %122 = vmatprep.subr.mxu0 %v86
    %123 = vmatpush1.msra.mxu0 %v85
    %124 = vmatprep.subr.mxu0 %v90
    %125 = vmatpush1.msra.mxu0 %v89
    %126 = vmatprep.subr.mxu0 0.0
    %127 = vmatpush1.msra.mxu0 0.0
    %128 = vmatprep.subr.mxu0 0.0
    %129 = vmatpush1.msra.mxu0 0.0
    %130 = vmatprep.subr.mxu0 0.0
    %131 = vmatpush1.msra.mxu0 0.0
    %132 = vmatprep.subr.mxu0 0.0
    %133 = vmatpush1.msra.mxu0 0.0
    %134 = vmatprep.subr.mxu0 0.0
    %135 = vmatpush1.msra.mxu0 0.0
    %136 = vmatprep.subr.mxu0 0.0
    %137 = vmatpush1.msra.mxu0 0.0
    %138 = vmatprep.subr.mxu0 0.0
    %139 = vmatpush1.msra.mxu0 0.0
    %140 = vmatprep.subr.mxu0 0.0
    %141 = vmatpush1.msra.mxu0 0.0
    %142 = vmatprep.subr.mxu0 0.0
    %143 = vmatpush1.msra.mxu0 0.0
    %144 = vmatprep.subr.mxu0 0.0
    %145 = vmatpush1.msra.mxu0 0.0
    %146 = vmatprep.subr.mxu0 0.0
    %147 = vmatpush1.msra.mxu0 0.0
    %148 = vmatprep.subr.mxu0 0.0
    %149 = vmatpush1.msra.mxu0 0.0
    %150 = vmatprep.subr.mxu0 0.0
    %151 = vmatpush1.msra.mxu0 0.0
    %152 = vmatprep.subr.mxu0 0.0
    %153 = vmatpush1.msra.mxu0 0.0
    %154 = vmatprep.subr.mxu0 0.0
    %155 = vmatpush1.msra.mxu0 0.0
    %156 = vmatprep.subr.mxu0 0.0
    %157 = vmatpush1.msra.mxu0 0.0
    %158 = vmatprep.subr.mxu0 0.0
    %159 = vmatpush1.msra.mxu0 0.0
    %160 = vmatprep.subr.mxu0 0.0
    %161 = vmatpush1.msra.mxu0 0.0
    %162 = vmatprep.subr.mxu0 0.0
    %163 = vmatpush1.msra.mxu0 0.0
    %164 = vmatprep.subr.mxu0 0.0
    %165 = vmatpush1.msra.mxu0 0.0
    %166 = vmatprep.subr.mxu0 0.0
    %167 = vmatpush1.msra.mxu0 0.0
    %168 = vmatprep.subr.mxu0 0.0
    %169 = vmatpush1.msra.mxu0 0.0
    %170 = vmatprep.subr.mxu0 0.0
    %171 = vmatpush1.msra.mxu0 0.0
    %172 = vmatprep.subr.mxu0 0.0
    %173 = vmatpush1.msra.mxu0 0.0
    %174 = vmatprep.subr.mxu0 0.0
    %175 = vmatpush1.msra.mxu0 0.0
    %176 = vmatprep.subr.mxu0 0.0
    %177 = vmatpush1.msra.mxu0 0.0
    %178 = vmatprep.subr.mxu0 0.0
    %179 = vmatpush1.msra.mxu0 0.0
    %180 = vmatprep.subr.mxu0 0.0
    %181 = vmatpush1.msra.mxu0 0.0
    %182 = vmatprep.subr.mxu0 0.0
    %183 = vmatpush1.msra.mxu0 0.0
    %184 = vmatprep.subr.mxu0 0.0
    %185 = vmatpush1.msra.mxu0 0.0
    %186 = vmatprep.mubr.f32.mxu0 0.0
    %187 = vmatmul.mubr.f32.gmra.mrb[0].mxu0 %v117
    %v188 = vpop.f32.mrb[0].mxu0
    %v189 = vadd.f32 %v98, %v188
    %v190 = vpop.f32.mrb[0].mxu0
    %v191 = vadd.f32 %v102, %v190
    %192 = vmatprep.mubr.f32.mxu0 0.0
    %193 = vmatmul.mubr.f32.gmra.mrb[0].mxu0 %v120
    %v194 = vpop.f32.mrb[0].mxu0
    %v195 = vadd.f32 %v98, %v194
    %v196 = vpop.f32.mrb[0].mxu0
    %v197 = vadd.f32 %v102, %v196
    %198 = vdwg.mxu0
    %199 = vmatprep.subr.mxu0 %v88
    %200 = vmatpush1.msra.mxu0 %v87
    %201 = vmatprep.subr.mxu0 %v92
    %202 = vmatpush1.msra.mxu0 %v91
    %203 = vmatprep.subr.mxu0 0.0
    %204 = vmatpush1.msra.mxu0 0.0
    %205 = vmatprep.subr.mxu0 0.0
    %206 = vmatpush1.msra.mxu0 0.0
    %207 = vmatprep.subr.mxu0 0.0
    %208 = vmatpush1.msra.mxu0 0.0
    %209 = vmatprep.subr.mxu0 0.0
    %210 = vmatpush1.msra.mxu0 0.0
    %211 = vmatprep.subr.mxu0 0.0
    %212 = vmatpush1.msra.mxu0 0.0
    %213 = vmatprep.subr.mxu0 0.0
    %214 = vmatpush1.msra.mxu0 0.0
    %215 = vmatprep.subr.mxu0 0.0
    %216 = vmatpush1.msra.mxu0 0.0
    %217 = vmatprep.subr.mxu0 0.0
    %218 = vmatpush1.msra.mxu0 0.0
    %219 = vmatprep.subr.mxu0 0.0
    %220 = vmatpush1.msra.mxu0 0.0
    %221 = vmatprep.subr.mxu0 0.0
    %222 = vmatpush1.msra.mxu0 0.0
    %223 = vmatprep.subr.mxu0 0.0
    %224 = vmatpush1.msra.mxu0 0.0
    %225 = vmatprep.subr.mxu0 0.0
    %226 = vmatpush1.msra.mxu0 0.0
    %227 = vmatprep.subr.mxu0 0.0
    %228 = vmatpush1.msra.mxu0 0.0
    %229 = vmatprep.subr.mxu0 0.0
    %230 = vmatpush1.msra.mxu0 0.0
    %231 = vmatprep.subr.mxu0 0.0
    %232 = vmatpush1.msra.mxu0 0.0
    %233 = vmatprep.subr.mxu0 0.0
    %234 = vmatpush1.msra.mxu0 0.0
    %235 = vmatprep.subr.mxu0 0.0
    %236 = vmatpush1.msra.mxu0 0.0
    %237 = vmatprep.subr.mxu0 0.0
    %238 = vmatpush1.msra.mxu0 0.0
    %239 = vmatprep.subr.mxu0 0.0
    %240 = vmatpush1.msra.mxu0 0.0
    %241 = vmatprep.subr.mxu0 0.0
    %242 = vmatpush1.msra.mxu0 0.0
    %243 = vmatprep.subr.mxu0 0.0
    %244 = vmatpush1.msra.mxu0 0.0
    %245 = vmatprep.subr.mxu0 0.0
    %246 = vmatpush1.msra.mxu0 0.0
    %247 = vmatprep.subr.mxu0 0.0
    %248 = vmatpush1.msra.mxu0 0.0
    %249 = vmatprep.subr.mxu0 0.0
    %250 = vmatpush1.msra.mxu0 0.0
    %251 = vmatprep.subr.mxu0 0.0
    %252 = vmatpush1.msra.mxu0 0.0
    %253 = vmatprep.subr.mxu0 0.0
    %254 = vmatpush1.msra.mxu0 0.0
    %255 = vmatprep.subr.mxu0 0.0
    %256 = vmatpush1.msra.mxu0 0.0
    %257 = vmatprep.subr.mxu0 0.0
    %258 = vmatpush1.msra.mxu0 0.0
    %259 = vmatprep.subr.mxu0 0.0
    %260 = vmatpush1.msra.mxu0 0.0
    %261 = vmatprep.subr.mxu0 0.0
    %262 = vmatpush1.msra.mxu0 0.0
    %263 = vmatprep.mubr.f32.mxu0 0.0
    %264 = vmatmul.mubr.f32.gmra.mrb[0].mxu0 %v117
    %v265 = vpop.f32.mrb[0].mxu0
    %v266 = vadd.f32 %v106, %v265
    %v267 = vpop.f32.mrb[0].mxu0
    %v268 = vadd.f32 %v110, %v267
    %269 = vmatprep.mubr.f32.mxu0 0.0
    %270 = vmatmul.mubr.f32.gmra.mrb[0].mxu0 %v120
    %v271 = vpop.f32.mrb[0].mxu0
    %v272 = vadd.f32 %v106, %v271
    %v273 = vpop.f32.mrb[0].mxu0
    %v274 = vadd.f32 %v110, %v273
    %275 = vdwg.mxu0
    %v276 = vmax.f32 %v189, 0.0
    %v277 = vmax.f32 %v191, 0.0
    %v278 = vmax.f32 %v266, 0.0
    %v279 = vmax.f32 %v268, 0.0
    %v280 = vmax.f32 %v195, 0.0
    %v281 = vmax.f32 %v197, 0.0
    %v282 = vmax.f32 %v272, 0.0
    %v283 = vmax.f32 %v274, 0.0
    %292 = vrot.lane.b32.xlu0 %v276, 96
    %v293 = vpop.permute.xlu0 %292
    %294 = vrot.lane.b32.xlu0 %v277, 96
    %v295 = vpop.permute.xlu0 %294
    %296 = vrot.lane.b32.xlu0 %v278, 96
    %v297 = vpop.permute.xlu0 %296
    %298 = vrot.lane.b32.xlu0 %v279, 96
    %v299 = vpop.permute.xlu0 %298
    %300 = vrot.lane.b32.xlu0 %v280, 96
    %v301 = vpop.permute.xlu0 %300
    %302 = vrot.lane.b32.xlu0 %v281, 96
    %v303 = vpop.permute.xlu0 %302
    %304 = vrot.lane.b32.xlu0 %v282, 96
    %v305 = vpop.permute.xlu0 %304
    %306 = vrot.lane.b32.xlu0 %v283, 96
    %v307 = vpop.permute.xlu0 %306
    %vm308 = vcmask 785408
    %v309 = vsel %vm308, %v293, %v295
    %v310 = vsel %vm308, %v295, %v297
    %v311 = vsel %vm308, %v297, %v299
    %v312 = vsel %vm308, %v301, %v303
    %v313 = vsel %vm308, %v303, %v305
    %v314 = vsel %vm308, %v305, %v307
    %v323 = vsel %vm308, %v299, 0.0
    %v324 = vsel %vm308, %v307, 0.0
    %v325 = vmax.f32 %v276, %v309
    %v326 = vmax.f32 %v277, %v310
    %v327 = vmax.f32 %v278, %v311
    %v328 = vmax.f32 %v279, %v323
    %v329 = vmax.f32 %v280, %v312
    %v330 = vmax.f32 %v281, %v313
    %v331 = vmax.f32 %v282, %v314
    %v332 = vmax.f32 %v283, %v324
    %v333 = vld [vmem:[#allocation5] sm:$0xff]
    %v334 = vld [vmem:[#allocation5 + $0x8] sm:$0xff]
    %v335 = vld [vmem:[#allocation5 + $0x10] sm:$0xff]
    %v336 = vld [vmem:[#allocation5 + $0x18] sm:$0xff]
    %v337 = vld [vmem:[#allocation5 + $0x20] sm:$0xff]
    %v338 = vld [vmem:[#allocation5 + $0x28] sm:$0xff]
    %v339 = vld [vmem:[#allocation5 + $0x30] sm:$0xff]
    %v340 = vld [vmem:[#allocation5 + $0x38] sm:$0xff]
    %v341 = vld [vmem:[#allocation5 + $0x40] sm:$0xff]
    %v342 = vld [vmem:[#allocation5 + $0x48] sm:$0xff]
    %v343 = vld [vmem:[#allocation5 + $0x50] sm:$0xff]
    %v344 = vld [vmem:[#allocation5 + $0x58] sm:$0xff]
    %v345 = vld [vmem:[#allocation5 + $0x60] sm:$0xff]
    %v346 = vld [vmem:[#allocation5 + $0x68] sm:$0xff]
    %v347 = vld [vmem:[#allocation5 + $0x70] sm:$0xff]
    %v348 = vld [vmem:[#allocation5 + $0x78] sm:$0xff]
    %v349 = vld [vmem:[#allocation5 + $0x80] sm:$0xff]
    %v350 = vld [vmem:[#allocation5 + $0x88] sm:$0xff]
    %v351 = vld [vmem:[#allocation5 + $0x90] sm:$0xff]
    %v352 = vld [vmem:[#allocation5 + $0x98] sm:$0xff]
    %v353 = vld [vmem:[#allocation5 + $0xa0] sm:$0xff]
    %v354 = vld [vmem:[#allocation5 + $0xa8] sm:$0xff]
    %v355 = vld [vmem:[#allocation5 + $0xb0] sm:$0xff]
    %v356 = vld [vmem:[#allocation5 + $0xb8] sm:$0xff]
    %v357 = vld [vmem:[#allocation5 + $0xc0] sm:$0xff]
    %v358 = vld [vmem:[#allocation5 + $0xc8] sm:$0xff]
    %v359 = vld [vmem:[#allocation5 + $0xd0] sm:$0xff]
    %v360 = vld [vmem:[#allocation5 + $0xd8] sm:$0xff]
    %v361 = vld [vmem:[#allocation5 + $0xe0] sm:$0xff]
    %v362 = vld [vmem:[#allocation5 + $0xe8] sm:$0xff]
    %v363 = vld [vmem:[#allocation5 + $0xf0] sm:$0xff]
    %v364 = vld [vmem:[#allocation5 + $0xf8] sm:$0xff]
    %v365 = vld [vmem:[#allocation5 + $0x100] sm:$0xff]
    %v366 = vld [vmem:[#allocation5 + $0x108] sm:$0xff]
    %v367 = vld [vmem:[#allocation5 + $0x110] sm:$0xff]
    %v368 = vld [vmem:[#allocation5 + $0x118] sm:$0xff]
    %v369 = vld [vmem:[#allocation5 + $0x120] sm:$0xff]
    %v370 = vld [vmem:[#allocation5 + $0x128] sm:$0xff]
    %v371 = vld [vmem:[#allocation5 + $0x130] sm:$0xff]
    %v372 = vld [vmem:[#allocation5 + $0x138] sm:$0xff]
    %v373 = vld [vmem:[#allocation5 + $0x140] sm:$0xff]
    %v374 = vld [vmem:[#allocation5 + $0x148] sm:$0xff]
    %v375 = vld [vmem:[#allocation5 + $0x150] sm:$0xff]
    %v376 = vld [vmem:[#allocation5 + $0x158] sm:$0xff]
    %v377 = vld [vmem:[#allocation5 + $0x160] sm:$0xff]
    %v378 = vld [vmem:[#allocation5 + $0x168] sm:$0xff]
    %v379 = vld [vmem:[#allocation5 + $0x170] sm:$0xff]
    %v380 = vld [vmem:[#allocation5 + $0x178] sm:$0xff]
    %v381 = vld [vmem:[#allocation5 + $0x180] sm:$0xff]
    %v382 = vld [vmem:[#allocation5 + $0x188] sm:$0xff]
    %v383 = vld [vmem:[#allocation5 + $0x190] sm:$0xff]
    %v384 = vld [vmem:[#allocation5 + $0x198] sm:$0xff]
    %v385 = vld [vmem:[#allocation5 + $0x1a0] sm:$0xff]
    %v386 = vld [vmem:[#allocation5 + $0x1a8] sm:$0xff]
    %v387 = vld [vmem:[#allocation5 + $0x1b0] sm:$0xff]
    %v388 = vld [vmem:[#allocation5 + $0x1b8] sm:$0xff]
    %v389 = vld [vmem:[#allocation5 + $0x1c0] sm:$0xff]
    %v390 = vld [vmem:[#allocation5 + $0x1c8] sm:$0xff]
    %v391 = vld [vmem:[#allocation5 + $0x1d0] sm:$0xff]
    %v392 = vld [vmem:[#allocation5 + $0x1d8] sm:$0xff]
    %v393 = vld [vmem:[#allocation5 + $0x1e0] sm:$0xff]
    %v394 = vld [vmem:[#allocation5 + $0x1e8] sm:$0xff]
    %v395 = vld [vmem:[#allocation5 + $0x1f0] sm:$0xff]
    %v396 = vld [vmem:[#allocation5 + $0x1f8] sm:$0xff]
    %v397 = vld [vmem:[%s4] sm:$0x1]
    %v399 = vlaneseq
    %v400 = vshrl.u32 %v399, 7
    %v401 = vsub.s32 0, %v400
    %v402 = vrot.slane %v397, %v401
    %404 = vmatprep.subr.mxu0 0.0
    %405 = vmatpush1.msra.mxu0 %v333
    %406 = vmatprep.subr.mxu0 0.0
    %407 = vmatpush1.msra.mxu0 %v334
    %408 = vmatprep.subr.mxu0 0.0
    %409 = vmatpush1.msra.mxu0 %v335
    %410 = vmatprep.subr.mxu0 0.0
    %411 = vmatpush1.msra.mxu0 %v336
    %412 = vmatprep.subr.mxu0 0.0
    %413 = vmatpush1.msra.mxu0 %v337
    %414 = vmatprep.subr.mxu0 0.0
    %415 = vmatpush1.msra.mxu0 %v338
    %416 = vmatprep.subr.mxu0 0.0
    %417 = vmatpush1.msra.mxu0 %v339
    %418 = vmatprep.subr.mxu0 0.0
    %419 = vmatpush1.msra.mxu0 %v340
    %420 = vmatprep.subr.mxu0 0.0
    %421 = vmatpush1.msra.mxu0 %v341
    %422 = vmatprep.subr.mxu0 0.0
    %423 = vmatpush1.msra.mxu0 %v342
    %424 = vmatprep.subr.mxu0 0.0
    %425 = vmatpush1.msra.mxu0 %v343
    %426 = vmatprep.subr.mxu0 0.0
    %427 = vmatpush1.msra.mxu0 %v344
    %428 = vmatprep.subr.mxu0 0.0
    %429 = vmatpush1.msra.mxu0 %v345
    %430 = vmatprep.subr.mxu0 0.0
    %431 = vmatpush1.msra.mxu0 %v346
    %432 = vmatprep.subr.mxu0 0.0
    %433 = vmatpush1.msra.mxu0 %v347
    %434 = vmatprep.subr.mxu0 0.0
    %435 = vmatpush1.msra.mxu0 %v348
    %436 = vmatprep.subr.mxu0 0.0
    %437 = vmatpush1.msra.mxu0 %v349
    %438 = vmatprep.subr.mxu0 0.0
    %439 = vmatpush1.msra.mxu0 %v350
    %440 = vmatprep.subr.mxu0 0.0
    %441 = vmatpush1.msra.mxu0 %v351
    %442 = vmatprep.subr.mxu0 0.0
    %443 = vmatpush1.msra.mxu0 %v352
    %444 = vmatprep.subr.mxu0 0.0
    %445 = vmatpush1.msra.mxu0 %v353
    %446 = vmatprep.subr.mxu0 0.0
    %447 = vmatpush1.msra.mxu0 %v354
    %448 = vmatprep.subr.mxu0 0.0
    %449 = vmatpush1.msra.mxu0 %v355
    %450 = vmatprep.subr.mxu0 0.0
    %451 = vmatpush1.msra.mxu0 %v356
    %452 = vmatprep.subr.mxu0 0.0
    %453 = vmatpush1.msra.mxu0 %v357
    %454 = vmatprep.subr.mxu0 0.0
    %455 = vmatpush1.msra.mxu0 %v358
    %456 = vmatprep.subr.mxu0 0.0
    %457 = vmatpush1.msra.mxu0 %v359
    %458 = vmatprep.subr.mxu0 0.0
    %459 = vmatpush1.msra.mxu0 %v360
    %460 = vmatprep.subr.mxu0 0.0
    %461 = vmatpush1.msra.mxu0 %v361
    %462 = vmatprep.subr.mxu0 0.0
    %463 = vmatpush1.msra.mxu0 %v362
    %464 = vmatprep.subr.mxu0 0.0
    %465 = vmatpush1.msra.mxu0 %v363
    %466 = vmatprep.subr.mxu0 0.0
    %467 = vmatpush1.msra.mxu0 %v364
    %468 = vmatprep.mubr.f32.mxu0 %v326
    %469 = vmatmul.mubr.f32.gmra.mrb[0].mxu0 %v325
    %v470 = vpop.f32.mrb[0].mxu0
    %v471 = vadd.f32 %v402, %v470
    %v472 = vpop.f32.mrb[0].mxu0
    %473 = vmatprep.mubr.f32.mxu0 %v330
    %474 = vmatmul.mubr.f32.gmra.mrb[0].mxu0 %v329
    %v475 = vpop.f32.mrb[0].mxu0
    %v476 = vadd.f32 %v402, %v475
    %v477 = vpop.f32.mrb[0].mxu0
    %478 = vdwg.mxu0
    %479 = vmatprep.subr.mxu0 0.0
    %480 = vmatpush1.msra.mxu0 %v365
    %481 = vmatprep.subr.mxu0 0.0
    %482 = vmatpush1.msra.mxu0 %v366
    %483 = vmatprep.subr.mxu0 0.0
    %484 = vmatpush1.msra.mxu0 %v367
    %485 = vmatprep.subr.mxu0 0.0
    %486 = vmatpush1.msra.mxu0 %v368
    %487 = vmatprep.subr.mxu0 0.0
    %488 = vmatpush1.msra.mxu0 %v369
    %489 = vmatprep.subr.mxu0 0.0
    %490 = vmatpush1.msra.mxu0 %v370
    %491 = vmatprep.subr.mxu0 0.0
    %492 = vmatpush1.msra.mxu0 %v371
    %493 = vmatprep.subr.mxu0 0.0
    %494 = vmatpush1.msra.mxu0 %v372
    %495 = vmatprep.subr.mxu0 0.0
    %496 = vmatpush1.msra.mxu0 %v373
    %497 = vmatprep.subr.mxu0 0.0
    %498 = vmatpush1.msra.mxu0 %v374
    %499 = vmatprep.subr.mxu0 0.0
    %500 = vmatpush1.msra.mxu0 %v375
    %501 = vmatprep.subr.mxu0 0.0
    %502 = vmatpush1.msra.mxu0 %v376
    %503 = vmatprep.subr.mxu0 0.0
    %504 = vmatpush1.msra.mxu0 %v377
    %505 = vmatprep.subr.mxu0 0.0
    %506 = vmatpush1.msra.mxu0 %v378
    %507 = vmatprep.subr.mxu0 0.0
    %508 = vmatpush1.msra.mxu0 %v379
    %509 = vmatprep.subr.mxu0 0.0
    %510 = vmatpush1.msra.mxu0 %v380
    %511 = vmatprep.subr.mxu0 0.0
    %512 = vmatpush1.msra.mxu0 %v381
    %513 = vmatprep.subr.mxu0 0.0
    %514 = vmatpush1.msra.mxu0 %v382
    %515 = vmatprep.subr.mxu0 0.0
    %516 = vmatpush1.msra.mxu0 %v383
    %517 = vmatprep.subr.mxu0 0.0
    %518 = vmatpush1.msra.mxu0 %v384
    %519 = vmatprep.subr.mxu0 0.0
    %520 = vmatpush1.msra.mxu0 %v385
    %521 = vmatprep.subr.mxu0 0.0
    %522 = vmatpush1.msra.mxu0 %v386
    %523 = vmatprep.subr.mxu0 0.0
    %524 = vmatpush1.msra.mxu0 %v387
    %525 = vmatprep.subr.mxu0 0.0
    %526 = vmatpush1.msra.mxu0 %v388
    %527 = vmatprep.subr.mxu0 0.0
    %528 = vmatpush1.msra.mxu0 %v389
    %529 = vmatprep.subr.mxu0 0.0
    %530 = vmatpush1.msra.mxu0 %v390
    %531 = vmatprep.subr.mxu0 0.0
    %532 = vmatpush1.msra.mxu0 %v391
    %533 = vmatprep.subr.mxu0 0.0
    %534 = vmatpush1.msra.mxu0 %v392
    %535 = vmatprep.subr.mxu0 0.0
    %536 = vmatpush1.msra.mxu0 %v393
    %537 = vmatprep.subr.mxu0 0.0
    %538 = vmatpush1.msra.mxu0 %v394
    %539 = vmatprep.subr.mxu0 0.0
    %540 = vmatpush1.msra.mxu0 %v395
    %541 = vmatprep.subr.mxu0 0.0
    %542 = vmatpush1.msra.mxu0 %v396
    %543 = vmatprep.mubr.f32.mxu0 %v328
    %544 = vmatmul.mubr.f32.gmra.mrb[0].mxu0 %v327
    %v545 = vpop.f32.mrb[0].mxu0
    %v546 = vadd.f32 %v471, %v545
    %v547 = vpop.f32.mrb[0].mxu0
    %548 = vmatprep.mubr.f32.mxu0 %v332
    %549 = vmatmul.mubr.f32.gmra.mrb[0].mxu0 %v331
    %v550 = vpop.f32.mrb[0].mxu0
    %v551 = vadd.f32 %v476, %v550
    %v552 = vpop.f32.mrb[0].mxu0
    %553 = vdwg.mxu0
    %v554 = vmax.f32 %v546, 0.0
    %v555 = vmax.f32 %v551, 0.0
    %558 = vrot.lane.b32.xlu0 %v554, 112
    %v559 = vpop.permute.xlu0 %558
    %560 = vrot.lane.b32.xlu0 %v555, 112
    %v561 = vpop.permute.xlu0 %560
    %vm564 = vcmask 916480
    %v565 = vsel %vm564, %v559, 0.0
    %v566 = vsel %vm564, %v561, 0.0
    %v567 = vmax.f32 %v554, %v565
    %v568 = vmax.f32 %v555, %v566
    %v569 = vld [vmem:[%s5] sm:$0xff]
    %v570 = vld [vmem:[%s5 + $0x8] sm:$0xff]
    %v571 = vld [vmem:[%s5 + $0x10] sm:$0xff]
    %v572 = vld [vmem:[%s5 + $0x18] sm:$0xff]
    %v573 = vld [vmem:[%s5 + $0x20] sm:$0xff]
    %v574 = vld [vmem:[%s5 + $0x28] sm:$0xff]
    %v575 = vld [vmem:[%s5 + $0x30] sm:$0xff]
    %v576 = vld [vmem:[%s5 + $0x38] sm:$0xff]
    %v577 = vld [vmem:[%s5 + $0x40] sm:$0xff]
    %v578 = vld [vmem:[%s5 + $0x48] sm:$0xff]
    %v579 = vld [vmem:[%s5 + $0x50] sm:$0xff]
    %v580 = vld [vmem:[%s5 + $0x58] sm:$0xff]
    %v581 = vld [vmem:[%s5 + $0x60] sm:$0xff]
    %v582 = vld [vmem:[%s5 + $0x68] sm:$0xff]
    %v583 = vld [vmem:[%s5 + $0x70] sm:$0xff]
    %v584 = vld [vmem:[%s5 + $0x78] sm:$0xff]
    %v585 = vld [vmem:[%s7] sm:$0x1]
    %v587 = vlaneseq
    %v588 = vshrl.u32 %v587, 7
    %v589 = vsub.s32 0, %v588
    %v590 = vrot.slane %v585, %v589
    %592 = vmatprep.subr.mxu0 0.0
    %593 = vmatpush1.msra.mxu0 %v569
    %594 = vmatprep.subr.mxu0 0.0
    %595 = vmatpush1.msra.mxu0 %v570
    %596 = vmatprep.subr.mxu0 0.0
    %597 = vmatpush1.msra.mxu0 %v571
    %598 = vmatprep.subr.mxu0 0.0
    %599 = vmatpush1.msra.mxu0 %v572
    %600 = vmatprep.subr.mxu0 0.0
    %601 = vmatpush1.msra.mxu0 %v573
    %602 = vmatprep.subr.mxu0 0.0
    %603 = vmatpush1.msra.mxu0 %v574
    %604 = vmatprep.subr.mxu0 0.0
    %605 = vmatpush1.msra.mxu0 %v575
    %606 = vmatprep.subr.mxu0 0.0
    %607 = vmatpush1.msra.mxu0 %v576
    %608 = vmatprep.subr.mxu0 0.0
    %609 = vmatpush1.msra.mxu0 %v577
    %610 = vmatprep.subr.mxu0 0.0
    %611 = vmatpush1.msra.mxu0 %v578
    %612 = vmatprep.subr.mxu0 0.0
    %613 = vmatpush1.msra.mxu0 %v579
    %614 = vmatprep.subr.mxu0 0.0
    %615 = vmatpush1.msra.mxu0 %v580
    %616 = vmatprep.subr.mxu0 0.0
    %617 = vmatpush1.msra.mxu0 %v581
    %618 = vmatprep.subr.mxu0 0.0
    %619 = vmatpush1.msra.mxu0 %v582
    %620 = vmatprep.subr.mxu0 0.0
    %621 = vmatpush1.msra.mxu0 %v583
    %622 = vmatprep.subr.mxu0 0.0
    %623 = vmatpush1.msra.mxu0 %v584
    %624 = vmatprep.subr.mxu0 0.0
    %625 = vmatpush1.msra.mxu0 0.0
    %626 = vmatprep.subr.mxu0 0.0
    %627 = vmatpush1.msra.mxu0 0.0
    %628 = vmatprep.subr.mxu0 0.0
    %629 = vmatpush1.msra.mxu0 0.0
    %630 = vmatprep.subr.mxu0 0.0
    %631 = vmatpush1.msra.mxu0 0.0
    %632 = vmatprep.subr.mxu0 0.0
    %633 = vmatpush1.msra.mxu0 0.0
    %634 = vmatprep.subr.mxu0 0.0
    %635 = vmatpush1.msra.mxu0 0.0
    %636 = vmatprep.subr.mxu0 0.0
    %637 = vmatpush1.msra.mxu0 0.0
    %638 = vmatprep.subr.mxu0 0.0
    %639 = vmatpush1.msra.mxu0 0.0
    %640 = vmatprep.subr.mxu0 0.0
    %641 = vmatpush1.msra.mxu0 0.0
    %642 = vmatprep.subr.mxu0 0.0
    %643 = vmatpush1.msra.mxu0 0.0
    %644 = vmatprep.subr.mxu0 0.0
    %645 = vmatpush1.msra.mxu0 0.0
    %646 = vmatprep.subr.mxu0 0.0
    %647 = vmatpush1.msra.mxu0 0.0
    %648 = vmatprep.subr.mxu0 0.0
    %649 = vmatpush1.msra.mxu0 0.0
    %650 = vmatprep.subr.mxu0 0.0
    %651 = vmatpush1.msra.mxu0 0.0
    %652 = vmatprep.subr.mxu0 0.0
    %653 = vmatpush1.msra.mxu0 0.0
    %654 = vmatprep.subr.mxu0 0.0
    %655 = vmatpush1.msra.mxu0 0.0
    %656 = vmatprep.mubr.f32.mxu0 0.0
    %657 = vmatmul.mubr.f32.gmra.mrb[0].mxu0 %v567
    %v658 = vpop.f32.mrb[0].mxu0
    %v659 = vadd.f32 %v590, %v658
    %v660 = vpop.f32.mrb[0].mxu0
    %661 = vmatprep.mubr.f32.mxu0 0.0
    %662 = vmatmul.mubr.f32.gmra.mrb[0].mxu0 %v568
    %v663 = vpop.f32.mrb[0].mxu0
    %v664 = vadd.f32 %v590, %v663
    %v665 = vpop.f32.mrb[0].mxu0
    %666 = vdwg.mxu0
    %v667 = vld [vmem:[#allocation7] sm:$0xff]
    %v668 = vld [vmem:[#allocation7 + $0x8] sm:$0xff]
    %v669 = vld [vmem:[#allocation7 + $0x10] sm:$0xff]
    %v670 = vld [vmem:[#allocation7 + $0x18] sm:$0xff]
    %vm671 = vcmask 261120
    %v673 = vsel %vm671, 0.0, 0
    %675 = vmatprep.subr.mxu0 0.0
    %676 = vmatpush1.msra.mxu0 %v667
    %677 = vmatprep.subr.mxu0 0.0
    %678 = vmatpush1.msra.mxu0 %v668
    %679 = vmatprep.subr.mxu0 0.0
    %680 = vmatpush1.msra.mxu0 %v669
    %681 = vmatprep.subr.mxu0 0.0
    %682 = vmatpush1.msra.mxu0 %v670
    %683 = vmatprep.subr.mxu0 0.0
    %684 = vmatpush1.msra.mxu0 0.0
    %685 = vmatprep.subr.mxu0 0.0
    %686 = vmatpush1.msra.mxu0 0.0
    %687 = vmatprep.subr.mxu0 0.0
    %688 = vmatpush1.msra.mxu0 0.0
    %689 = vmatprep.subr.mxu0 0.0
    %690 = vmatpush1.msra.mxu0 0.0
    %691 = vmatprep.subr.mxu0 0.0
    %692 = vmatpush1.msra.mxu0 0.0
    %693 = vmatprep.subr.mxu0 0.0
    %694 = vmatpush1.msra.mxu0 0.0
    %695 = vmatprep.subr.mxu0 0.0
    %696 = vmatpush1.msra.mxu0 0.0
    %697 = vmatprep.subr.mxu0 0.0
    %698 = vmatpush1.msra.mxu0 0.0
    %699 = vmatprep.subr.mxu0 0.0
    %700 = vmatpush1.msra.mxu0 0.0
    %701 = vmatprep.subr.mxu0 0.0
    %702 = vmatpush1.msra.mxu0 0.0
    %703 = vmatprep.subr.mxu0 0.0
    %704 = vmatpush1.msra.mxu0 0.0
    %705 = vmatprep.subr.mxu0 0.0
    %706 = vmatpush1.msra.mxu0 0.0
    %707 = vmatprep.subr.mxu0 0.0
    %708 = vmatpush1.msra.mxu0 0.0
    %709 = vmatprep.subr.mxu0 0.0
    %710 = vmatpush1.msra.mxu0 0.0
    %711 = vmatprep.subr.mxu0 0.0
    %712 = vmatpush1.msra.mxu0 0.0
    %713 = vmatprep.subr.mxu0 0.0
    %714 = vmatpush1.msra.mxu0 0.0
    %715 = vmatprep.subr.mxu0 0.0
    %716 = vmatpush1.msra.mxu0 0.0
    %717 = vmatprep.subr.mxu0 0.0
    %718 = vmatpush1.msra.mxu0 0.0
    %719 = vmatprep.subr.mxu0 0.0
    %720 = vmatpush1.msra.mxu0 0.0
    %721 = vmatprep.subr.mxu0 0.0
    %722 = vmatpush1.msra.mxu0 0.0
    %723 = vmatprep.subr.mxu0 0.0
    %724 = vmatpush1.msra.mxu0 0.0
    %725 = vmatprep.subr.mxu0 0.0
    %726 = vmatpush1.msra.mxu0 0.0
    %727 = vmatprep.subr.mxu0 0.0
    %728 = vmatpush1.msra.mxu0 0.0
    %729 = vmatprep.subr.mxu0 0.0
    %730 = vmatpush1.msra.mxu0 0.0
    %731 = vmatprep.subr.mxu0 0.0
    %732 = vmatpush1.msra.mxu0 0.0
    %733 = vmatprep.subr.mxu0 0.0
    %734 = vmatpush1.msra.mxu0 0.0
    %735 = vmatprep.subr.mxu0 0.0
    %736 = vmatpush1.msra.mxu0 0.0
    %737 = vmatprep.subr.mxu0 0.0
    %738 = vmatpush1.msra.mxu0 0.0
    %739 = vmatprep.mubr.f32.mxu0 0.0
    %740 = vmatmul.mubr.f32.gmra.mrb[0].mxu0 %v673
    %v741 = vpop.f32.mrb[0].mxu0
    %v742 = vadd.f32 0.0, %v741
    %v743 = vpop.f32.mrb[0].mxu0
    %744 = vdwg.mxu0
    %v745 = vadd.f32 %v659, %v742
    %v746 = vxor.u32 %v745, 2147483648
    %v747 = vmul.f32 %v746, 1.442695
    %v748 = vpow.pop %v747
    %v749 = vadd.f32 %v748, 1.0
    %v750 = vrcp.pop %v749
    %v751 = vmul.f32 1.0, %v750
    %v752 = vtanh.pop %v745
    %v753 = vmul.f32 %v751, 0.0
    %755 = vrot.lane.b32.xlu0 %v752, 64
    %v756 = vpop.permute.xlu0 %755
    %v758 = vmul.f32 %v751, %v756
    %760 = vrot.lane.b32.xlu0 %v758, 32
    %v761 = vpop.permute.xlu0 %760
    %v763 = vadd.f32 %v753, %v761
    %v764 = vtanh.pop %v763
    %766 = vrot.lane.b32.xlu0 %v764, 64
    %v767 = vpop.permute.xlu0 %766
    %v769 = vmul.f32 %v751, %v767
    %771 = vrot.lane.b32.xlu0 %v769, 32
    %v772 = vpop.permute.xlu0 %771
    %v773 = vsel %vm671, %v772, 0
    %775 = vmatprep.subr.mxu0 0.0
    %776 = vmatpush1.msra.mxu0 %v667
    %777 = vmatprep.subr.mxu0 0.0
    %778 = vmatpush1.msra.mxu0 %v668
    %779 = vmatprep.subr.mxu0 0.0
    %780 = vmatpush1.msra.mxu0 %v669
    %781 = vmatprep.subr.mxu0 0.0
    %782 = vmatpush1.msra.mxu0 %v670
    %783 = vmatprep.subr.mxu0 0.0
    %784 = vmatpush1.msra.mxu0 0.0
    %785 = vmatprep.subr.mxu0 0.0
    %786 = vmatpush1.msra.mxu0 0.0
    %787 = vmatprep.subr.mxu0 0.0
    %788 = vmatpush1.msra.mxu0 0.0
    %789 = vmatprep.subr.mxu0 0.0
    %790 = vmatpush1.msra.mxu0 0.0
    %791 = vmatprep.subr.mxu0 0.0
    %792 = vmatpush1.msra.mxu0 0.0
    %793 = vmatprep.subr.mxu0 0.0
    %794 = vmatpush1.msra.mxu0 0.0
    %795 = vmatprep.subr.mxu0 0.0
    %796 = vmatpush1.msra.mxu0 0.0
    %797 = vmatprep.subr.mxu0 0.0
    %798 = vmatpush1.msra.mxu0 0.0
    %799 = vmatprep.subr.mxu0 0.0
    %800 = vmatpush1.msra.mxu0 0.0
    %801 = vmatprep.subr.mxu0 0.0
    %802 = vmatpush1.msra.mxu0 0.0
    %803 = vmatprep.subr.mxu0 0.0
    %804 = vmatpush1.msra.mxu0 0.0
    %805 = vmatprep.subr.mxu0 0.0
    %806 = vmatpush1.msra.mxu0 0.0
    %807 = vmatprep.subr.mxu0 0.0
    %808 = vmatpush1.msra.mxu0 0.0
    %809 = vmatprep.subr.mxu0 0.0
    %810 = vmatpush1.msra.mxu0 0.0
    %811 = vmatprep.subr.mxu0 0.0
    %812 = vmatpush1.msra.mxu0 0.0
    %813 = vmatprep.subr.mxu0 0.0
    %814 = vmatpush1.msra.mxu0 0.0
    %815 = vmatprep.subr.mxu0 0.0
    %816 = vmatpush1.msra.mxu0 0.0
    %817 = vmatprep.subr.mxu0 0.0
    %818 = vmatpush1.msra.mxu0 0.0
    %819 = vmatprep.subr.mxu0 0.0
    %820 = vmatpush1.msra.mxu0 0.0
    %821 = vmatprep.subr.mxu0 0.0
    %822 = vmatpush1.msra.mxu0 0.0
    %823 = vmatprep.subr.mxu0 0.0
    %824 = vmatpush1.msra.mxu0 0.0
    %825 = vmatprep.subr.mxu0 0.0
    %826 = vmatpush1.msra.mxu0 0.0
    %827 = vmatprep.subr.mxu0 0.0
    %828 = vmatpush1.msra.mxu0 0.0
    %829 = vmatprep.subr.mxu0 0.0
    %830 = vmatpush1.msra.mxu0 0.0
    %831 = vmatprep.subr.mxu0 0.0
    %832 = vmatpush1.msra.mxu0 0.0
    %833 = vmatprep.subr.mxu0 0.0
    %834 = vmatpush1.msra.mxu0 0.0
    %835 = vmatprep.subr.mxu0 0.0
    %836 = vmatpush1.msra.mxu0 0.0
    %837 = vmatprep.subr.mxu0 0.0
    %838 = vmatpush1.msra.mxu0 0.0
    %839 = vmatprep.mubr.f32.mxu0 0.0
    %840 = vmatmul.mubr.f32.gmra.mrb[0].mxu0 %v773
    %v841 = vpop.f32.mrb[0].mxu0
    %v842 = vadd.f32 0.0, %v841
    %v843 = vpop.f32.mrb[0].mxu0
    %844 = vdwg.mxu0
    %v846 = vrot.slane %v842, 6
    %v848 = vadd.f32 %v659, %v846
    %v849 = vxor.u32 %v848, 2147483648
    %v850 = vmul.f32 %v849, 1.442695
    %v851 = vpow.pop %v850
    %v852 = vadd.f32 %v851, 1.0
    %v853 = vrcp.pop %v852
    %v854 = vmul.f32 1.0, %v853
    %v855 = vtanh.pop %v848
    %v857 = vrot.slane %v763, 6
    %v859 = vmul.f32 %v854, %v857
    %861 = vrot.lane.b32.xlu0 %v855, 64
    %v862 = vpop.permute.xlu0 %861
    %v864 = vmul.f32 %v854, %v862
    %866 = vrot.lane.b32.xlu0 %v864, 32
    %v867 = vpop.permute.xlu0 %866
    %v869 = vadd.f32 %v859, %v867
    %v870 = vtanh.pop %v869
    %872 = vrot.lane.b32.xlu0 %v870, 64
    %v873 = vpop.permute.xlu0 %872
    %v875 = vmul.f32 %v854, %v873
    %v877 = vrot.slane %v875, 2
    %878 = vrot.lane.b32.xlu0 %v877, 32
    %v879 = vpop.permute.xlu0 %878
    %v880 = vsel %vm671, %v879, 0
    %882 = vmatprep.subr.mxu0 0.0
    %883 = vmatpush1.msra.mxu0 %v667
    %884 = vmatprep.subr.mxu0 0.0
    %885 = vmatpush1.msra.mxu0 %v668
    %886 = vmatprep.subr.mxu0 0.0
    %887 = vmatpush1.msra.mxu0 %v669
    %888 = vmatprep.subr.mxu0 0.0
    %889 = vmatpush1.msra.mxu0 %v670
    %890 = vmatprep.subr.mxu0 0.0
    %891 = vmatpush1.msra.mxu0 0.0
    %892 = vmatprep.subr.mxu0 0.0
    %893 = vmatpush1.msra.mxu0 0.0
    %894 = vmatprep.subr.mxu0 0.0
    %895 = vmatpush1.msra.mxu0 0.0
    %896 = vmatprep.subr.mxu0 0.0
    %897 = vmatpush1.msra.mxu0 0.0
    %898 = vmatprep.subr.mxu0 0.0
    %899 = vmatpush1.msra.mxu0 0.0
    %900 = vmatprep.subr.mxu0 0.0
    %901 = vmatpush1.msra.mxu0 0.0
    %902 = vmatprep.subr.mxu0 0.0
    %903 = vmatpush1.msra.mxu0 0.0
    %904 = vmatprep.subr.mxu0 0.0
    %905 = vmatpush1.msra.mxu0 0.0
    %906 = vmatprep.subr.mxu0 0.0
    %907 = vmatpush1.msra.mxu0 0.0
    %908 = vmatprep.subr.mxu0 0.0
    %909 = vmatpush1.msra.mxu0 0.0
    %910 = vmatprep.subr.mxu0 0.0
    %911 = vmatpush1.msra.mxu0 0.0
    %912 = vmatprep.subr.mxu0 0.0
    %913 = vmatpush1.msra.mxu0 0.0
    %914 = vmatprep.subr.mxu0 0.0
    %915 = vmatpush1.msra.mxu0 0.0
    %916 = vmatprep.subr.mxu0 0.0
    %917 = vmatpush1.msra.mxu0 0.0
    %918 = vmatprep.subr.mxu0 0.0
    %919 = vmatpush1.msra.mxu0 0.0
    %920 = vmatprep.subr.mxu0 0.0
    %921 = vmatpush1.msra.mxu0 0.0
    %922 = vmatprep.subr.mxu0 0.0
    %923 = vmatpush1.msra.mxu0 0.0
    %924 = vmatprep.subr.mxu0 0.0
    %925 = vmatpush1.msra.mxu0 0.0
    %926 = vmatprep.subr.mxu0 0.0
    %927 = vmatpush1.msra.mxu0 0.0
    %928 = vmatprep.subr.mxu0 0.0
    %929 = vmatpush1.msra.mxu0 0.0
    %930 = vmatprep.subr.mxu0 0.0
    %931 = vmatpush1.msra.mxu0 0.0
    %932 = vmatprep.subr.mxu0 0.0
    %933 = vmatpush1.msra.mxu0 0.0
    %934 = vmatprep.subr.mxu0 0.0
    %935 = vmatpush1.msra.mxu0 0.0
    %936 = vmatprep.subr.mxu0 0.0
    %937 = vmatpush1.msra.mxu0 0.0
    %938 = vmatprep.subr.mxu0 0.0
    %939 = vmatpush1.msra.mxu0 0.0
    %940 = vmatprep.subr.mxu0 0.0
    %941 = vmatpush1.msra.mxu0 0.0
    %942 = vmatprep.subr.mxu0 0.0
    %943 = vmatpush1.msra.mxu0 0.0
    %944 = vmatprep.subr.mxu0 0.0
    %945 = vmatpush1.msra.mxu0 0.0
    %946 = vmatprep.mubr.f32.mxu0 0.0
    %947 = vmatmul.mubr.f32.gmra.mrb[0].mxu0 %v880
    %v948 = vpop.f32.mrb[0].mxu0
    %v949 = vadd.f32 0.0, %v948
    %v950 = vpop.f32.mrb[0].mxu0
    %951 = vdwg.mxu0
    %v953 = vrot.slane %v949, 4
    %v955 = vadd.f32 %v659, %v953
    %v956 = vxor.u32 %v955, 2147483648
    %v957 = vmul.f32 %v956, 1.442695
    %v958 = vpow.pop %v957
    %v959 = vadd.f32 %v958, 1.0
    %v960 = vrcp.pop %v959
    %v961 = vmul.f32 1.0, %v960
    %v962 = vtanh.pop %v955
    %v964 = vrot.slane %v869, 6
    %v966 = vmul.f32 %v961, %v964
    %968 = vrot.lane.b32.xlu0 %v962, 64
    %v969 = vpop.permute.xlu0 %968
    %v971 = vmul.f32 %v961, %v969
    %973 = vrot.lane.b32.xlu0 %v971, 32
    %v974 = vpop.permute.xlu0 %973
    %v976 = vadd.f32 %v966, %v974
    %v977 = vtanh.pop %v976
    %979 = vrot.lane.b32.xlu0 %v977, 64
    %v980 = vpop.permute.xlu0 %979
    %v982 = vmul.f32 %v961, %v980
    %v984 = vrot.slane %v982, 4
    %985 = vrot.lane.b32.xlu0 %v984, 32
    %v986 = vpop.permute.xlu0 %985
    %v987 = vsel %vm671, %v986, 0
    %989 = vmatprep.subr.mxu0 0.0
    %990 = vmatpush1.msra.mxu0 %v667
    %991 = vmatprep.subr.mxu0 0.0
    %992 = vmatpush1.msra.mxu0 %v668
    %993 = vmatprep.subr.mxu0 0.0
    %994 = vmatpush1.msra.mxu0 %v669
    %995 = vmatprep.subr.mxu0 0.0
    %996 = vmatpush1.msra.mxu0 %v670
    %997 = vmatprep.subr.mxu0 0.0
    %998 = vmatpush1.msra.mxu0 0.0
    %999 = vmatprep.subr.mxu0 0.0
    %1000 = vmatpush1.msra.mxu0 0.0
    %1001 = vmatprep.subr.mxu0 0.0
    %1002 = vmatpush1.msra.mxu0 0.0
    %1003 = vmatprep.subr.mxu0 0.0
    %1004 = vmatpush1.msra.mxu0 0.0
    %1005 = vmatprep.subr.mxu0 0.0
    %1006 = vmatpush1.msra.mxu0 0.0
    %1007 = vmatprep.subr.mxu0 0.0
    %1008 = vmatpush1.msra.mxu0 0.0
    %1009 = vmatprep.subr.mxu0 0.0
    %1010 = vmatpush1.msra.mxu0 0.0
    %1011 = vmatprep.subr.mxu0 0.0
    %1012 = vmatpush1.msra.mxu0 0.0
    %1013 = vmatprep.subr.mxu0 0.0
    %1014 = vmatpush1.msra.mxu0 0.0
    %1015 = vmatprep.subr.mxu0 0.0
    %1016 = vmatpush1.msra.mxu0 0.0
    %1017 = vmatprep.subr.mxu0 0.0
    %1018 = vmatpush1.msra.mxu0 0.0
    %1019 = vmatprep.subr.mxu0 0.0
    %1020 = vmatpush1.msra.mxu0 0.0
    %1021 = vmatprep.subr.mxu0 0.0
    %1022 = vmatpush1.msra.mxu0 0.0
    %1023 = vmatprep.subr.mxu0 0.0
    %1024 = vmatpush1.msra.mxu0 0.0
    %1025 = vmatprep.subr.mxu0 0.0
    %1026 = vmatpush1.msra.mxu0 0.0
    %1027 = vmatprep.subr.mxu0 0.0
    %1028 = vmatpush1.msra.mxu0 0.0
    %1029 = vmatprep.subr.mxu0 0.0
    %1030 = vmatpush1.msra.mxu0 0.0
    %1031 = vmatprep.subr.mxu0 0.0
    %1032 = vmatpush1.msra.mxu0 0.0
    %1033 = vmatprep.subr.mxu0 0.0
    %1034 = vmatpush1.msra.mxu0 0.0
    %1035 = vmatprep.subr.mxu0 0.0
    %1036 = vmatpush1.msra.mxu0 0.0
    %1037 = vmatprep.subr.mxu0 0.0
    %1038 = vmatpush1.msra.mxu0 0.0
    %1039 = vmatprep.subr.mxu0 0.0
    %1040 = vmatpush1.msra.mxu0 0.0
    %1041 = vmatprep.subr.mxu0 0.0
    %1042 = vmatpush1.msra.mxu0 0.0
    %1043 = vmatprep.subr.mxu0 0.0
    %1044 = vmatpush1.msra.mxu0 0.0
    %1045 = vmatprep.subr.mxu0 0.0
    %1046 = vmatpush1.msra.mxu0 0.0
    %1047 = vmatprep.subr.mxu0 0.0
    %1048 = vmatpush1.msra.mxu0 0.0
    %1049 = vmatprep.subr.mxu0 0.0
    %1050 = vmatpush1.msra.mxu0 0.0
    %1051 = vmatprep.subr.mxu0 0.0
    %1052 = vmatpush1.msra.mxu0 0.0
    %1053 = vmatprep.mubr.f32.mxu0 0.0
    %1054 = vmatmul.mubr.f32.gmra.mrb[0].mxu0 %v987
    %v1055 = vpop.f32.mrb[0].mxu0
    %v1056 = vadd.f32 0.0, %v1055
    %v1057 = vpop.f32.mrb[0].mxu0
    %1058 = vdwg.mxu0
    %v1060 = vrot.slane %v1056, 2
    %v1062 = vadd.f32 %v659, %v1060
    %v1063 = vxor.u32 %v1062, 2147483648
    %v1064 = vmul.f32 %v1063, 1.442695
    %v1065 = vpow.pop %v1064
    %v1066 = vadd.f32 %v1065, 1.0
    %v1067 = vrcp.pop %v1066
    %v1068 = vmul.f32 1.0, %v1067
    %v1069 = vtanh.pop %v1062
    %v1071 = vrot.slane %v976, 6
    %v1073 = vmul.f32 %v1068, %v1071
    %1075 = vrot.lane.b32.xlu0 %v1069, 64
    %v1076 = vpop.permute.xlu0 %1075
    %v1078 = vmul.f32 %v1068, %v1076
    %1080 = vrot.lane.b32.xlu0 %v1078, 32
    %v1081 = vpop.permute.xlu0 %1080
    %v1083 = vadd.f32 %v1073, %v1081
    %v1084 = vtanh.pop %v1083
    %1086 = vrot.lane.b32.xlu0 %v1084, 64
    %v1087 = vpop.permute.xlu0 %1086
    %v1089 = vmul.f32 %v1068, %v1087
    %v1091 = vrot.slane %v1089, 6
    %1092 = vrot.lane.b32.xlu0 %v1091, 32
    %v1093 = vpop.permute.xlu0 %1092
    %v1094 = vsel %vm671, %v1093, 0
    %1096 = vmatprep.subr.mxu0 0.0
    %1097 = vmatpush1.msra.mxu0 %v667
    %1098 = vmatprep.subr.mxu0 0.0
    %1099 = vmatpush1.msra.mxu0 %v668
    %1100 = vmatprep.subr.mxu0 0.0
    %1101 = vmatpush1.msra.mxu0 %v669
    %1102 = vmatprep.subr.mxu0 0.0
    %1103 = vmatpush1.msra.mxu0 %v670
    %1104 = vmatprep.subr.mxu0 0.0
    %1105 = vmatpush1.msra.mxu0 0.0
    %1106 = vmatprep.subr.mxu0 0.0
    %1107 = vmatpush1.msra.mxu0 0.0
    %1108 = vmatprep.subr.mxu0 0.0
    %1109 = vmatpush1.msra.mxu0 0.0
    %1110 = vmatprep.subr.mxu0 0.0
    %1111 = vmatpush1.msra.mxu0 0.0
    %1112 = vmatprep.subr.mxu0 0.0
    %1113 = vmatpush1.msra.mxu0 0.0
    %1114 = vmatprep.subr.mxu0 0.0
    %1115 = vmatpush1.msra.mxu0 0.0
    %1116 = vmatprep.subr.mxu0 0.0
    %1117 = vmatpush1.msra.mxu0 0.0
    %1118 = vmatprep.subr.mxu0 0.0
    %1119 = vmatpush1.msra.mxu0 0.0
    %1120 = vmatprep.subr.mxu0 0.0
    %1121 = vmatpush1.msra.mxu0 0.0
    %1122 = vmatprep.subr.mxu0 0.0
    %1123 = vmatpush1.msra.mxu0 0.0
    %1124 = vmatprep.subr.mxu0 0.0
    %1125 = vmatpush1.msra.mxu0 0.0
    %1126 = vmatprep.subr.mxu0 0.0
    %1127 = vmatpush1.msra.mxu0 0.0
    %1128 = vmatprep.subr.mxu0 0.0
    %1129 = vmatpush1.msra.mxu0 0.0
    %1130 = vmatprep.subr.mxu0 0.0
    %1131 = vmatpush1.msra.mxu0 0.0
    %1132 = vmatprep.subr.mxu0 0.0
    %1133 = vmatpush1.msra.mxu0 0.0
    %1134 = vmatprep.subr.mxu0 0.0
    %1135 = vmatpush1.msra.mxu0 0.0
    %1136 = vmatprep.subr.mxu0 0.0
    %1137 = vmatpush1.msra.mxu0 0.0
    %1138 = vmatprep.subr.mxu0 0.0
    %1139 = vmatpush1.msra.mxu0 0.0
    %1140 = vmatprep.subr.mxu0 0.0
    %1141 = vmatpush1.msra.mxu0 0.0
    %1142 = vmatprep.subr.mxu0 0.0
    %1143 = vmatpush1.msra.mxu0 0.0
    %1144 = vmatprep.subr.mxu0 0.0
    %1145 = vmatpush1.msra.mxu0 0.0
    %1146 = vmatprep.subr.mxu0 0.0
    %1147 = vmatpush1.msra.mxu0 0.0
    %1148 = vmatprep.subr.mxu0 0.0
    %1149 = vmatpush1.msra.mxu0 0.0
    %1150 = vmatprep.subr.mxu0 0.0
    %1151 = vmatpush1.msra.mxu0 0.0
    %1152 = vmatprep.subr.mxu0 0.0
    %1153 = vmatpush1.msra.mxu0 0.0
    %1154 = vmatprep.subr.mxu0 0.0
    %1155 = vmatpush1.msra.mxu0 0.0
    %1156 = vmatprep.subr.mxu0 0.0
    %1157 = vmatpush1.msra.mxu0 0.0
    %1158 = vmatprep.subr.mxu0 0.0
    %1159 = vmatpush1.msra.mxu0 0.0
    %1160 = vmatprep.mubr.f32.mxu0 0.0
    %1161 = vmatmul.mubr.f32.gmra.mrb[0].mxu0 %v1094
    %v1162 = vpop.f32.mrb[0].mxu0
    %v1163 = vadd.f32 0.0, %v1162
    %v1164 = vpop.f32.mrb[0].mxu0
    %1165 = vdwg.mxu0
    %v1166 = vadd.f32 %v664, %v1163
    %v1167 = vxor.u32 %v1166, 2147483648
    %v1168 = vmul.f32 %v1167, 1.442695
    %v1169 = vpow.pop %v1168
    %v1170 = vadd.f32 %v1169, 1.0
    %v1171 = vrcp.pop %v1170
    %v1172 = vmul.f32 1.0, %v1171
    %v1173 = vtanh.pop %v1166
    %v1175 = vrot.slane %v1083, 6
    %v1177 = vmul.f32 %v1172, %v1175
    %1179 = vrot.lane.b32.xlu0 %v1173, 64
    %v1180 = vpop.permute.xlu0 %1179
    %v1182 = vmul.f32 %v1172, %v1180
    %1184 = vrot.lane.b32.xlu0 %v1182, 32
    %v1185 = vpop.permute.xlu0 %1184
    %v1187 = vadd.f32 %v1177, %v1185
    %v1188 = vtanh.pop %v1187
    %1190 = vrot.lane.b32.xlu0 %v1188, 64
    %v1191 = vpop.permute.xlu0 %1190
    %v1193 = vmul.f32 %v1172, %v1191
    %1195 = vrot.lane.b32.xlu0 %v1193, 32
    %v1196 = vpop.permute.xlu0 %1195
    %v1197 = vsel %vm671, %v1196, 0
    %1199 = vmatprep.subr.mxu0 0.0
    %1200 = vmatpush1.msra.mxu0 %v667
    %1201 = vmatprep.subr.mxu0 0.0
    %1202 = vmatpush1.msra.mxu0 %v668
    %1203 = vmatprep.subr.mxu0 0.0
    %1204 = vmatpush1.msra.mxu0 %v669
    %1205 = vmatprep.subr.mxu0 0.0
    %1206 = vmatpush1.msra.mxu0 %v670
    %1207 = vmatprep.subr.mxu0 0.0
    %1208 = vmatpush1.msra.mxu0 0.0
    %1209 = vmatprep.subr.mxu0 0.0
    %1210 = vmatpush1.msra.mxu0 0.0
    %1211 = vmatprep.subr.mxu0 0.0
    %1212 = vmatpush1.msra.mxu0 0.0
    %1213 = vmatprep.subr.mxu0 0.0
    %1214 = vmatpush1.msra.mxu0 0.0
    %1215 = vmatprep.subr.mxu0 0.0
    %1216 = vmatpush1.msra.mxu0 0.0
    %1217 = vmatprep.subr.mxu0 0.0
    %1218 = vmatpush1.msra.mxu0 0.0
    %1219 = vmatprep.subr.mxu0 0.0
    %1220 = vmatpush1.msra.mxu0 0.0
    %1221 = vmatprep.subr.mxu0 0.0
    %1222 = vmatpush1.msra.mxu0 0.0
    %1223 = vmatprep.subr.mxu0 0.0
    %1224 = vmatpush1.msra.mxu0 0.0
    %1225 = vmatprep.subr.mxu0 0.0
    %1226 = vmatpush1.msra.mxu0 0.0
    %1227 = vmatprep.subr.mxu0 0.0
    %1228 = vmatpush1.msra.mxu0 0.0
    %1229 = vmatprep.subr.mxu0 0.0
    %1230 = vmatpush1.msra.mxu0 0.0
    %1231 = vmatprep.subr.mxu0 0.0
    %1232 = vmatpush1.msra.mxu0 0.0
    %1233 = vmatprep.subr.mxu0 0.0
    %1234 = vmatpush1.msra.mxu0 0.0
    %1235 = vmatprep.subr.mxu0 0.0
    %1236 = vmatpush1.msra.mxu0 0.0
    %1237 = vmatprep.subr.mxu0 0.0
    %1238 = vmatpush1.msra.mxu0 0.0
    %1239 = vmatprep.subr.mxu0 0.0
    %1240 = vmatpush1.msra.mxu0 0.0
    %1241 = vmatprep.subr.mxu0 0.0
    %1242 = vmatpush1.msra.mxu0 0.0
    %1243 = vmatprep.subr.mxu0 0.0
    %1244 = vmatpush1.msra.mxu0 0.0
    %1245 = vmatprep.subr.mxu0 0.0
    %1246 = vmatpush1.msra.mxu0 0.0
    %1247 = vmatprep.subr.mxu0 0.0
    %1248 = vmatpush1.msra.mxu0 0.0
    %1249 = vmatprep.subr.mxu0 0.0
    %1250 = vmatpush1.msra.mxu0 0.0
    %1251 = vmatprep.subr.mxu0 0.0
    %1252 = vmatpush1.msra.mxu0 0.0
    %1253 = vmatprep.subr.mxu0 0.0
    %1254 = vmatpush1.msra.mxu0 0.0
    %1255 = vmatprep.subr.mxu0 0.0
    %1256 = vmatpush1.msra.mxu0 0.0
    %1257 = vmatprep.subr.mxu0 0.0
    %1258 = vmatpush1.msra.mxu0 0.0
    %1259 = vmatprep.subr.mxu0 0.0
    %1260 = vmatpush1.msra.mxu0 0.0
    %1261 = vmatprep.subr.mxu0 0.0
    %1262 = vmatpush1.msra.mxu0 0.0
    %1263 = vmatprep.mubr.f32.mxu0 0.0
    %1264 = vmatmul.mubr.f32.gmra.mrb[0].mxu0 %v1197
    %v1265 = vpop.f32.mrb[0].mxu0
    %v1266 = vadd.f32 0.0, %v1265
    %v1267 = vpop.f32.mrb[0].mxu0
    %1268 = vdwg.mxu0
    %v1270 = vrot.slane %v1266, 6
    %v1272 = vadd.f32 %v664, %v1270
    %v1273 = vxor.u32 %v1272, 2147483648
    %v1274 = vmul.f32 %v1273, 1.442695
    %v1275 = vpow.pop %v1274
    %v1276 = vadd.f32 %v1275, 1.0
    %v1277 = vrcp.pop %v1276
    %v1278 = vmul.f32 1.0, %v1277
    %v1279 = vtanh.pop %v1272
    %v1281 = vrot.slane %v1187, 6
    %v1283 = vmul.f32 %v1278, %v1281
    %1285 = vrot.lane.b32.xlu0 %v1279, 64
    %v1286 = vpop.permute.xlu0 %1285
    %v1288 = vmul.f32 %v1278, %v1286
    %1290 = vrot.lane.b32.xlu0 %v1288, 32
    %v1291 = vpop.permute.xlu0 %1290
    %v1293 = vadd.f32 %v1283, %v1291
    %v1294 = vtanh.pop %v1293
    %1296 = vrot.lane.b32.xlu0 %v1294, 64
    %v1297 = vpop.permute.xlu0 %1296
    %v1299 = vmul.f32 %v1278, %v1297
    %v1301 = vrot.slane %v1299, 2
    %1302 = vrot.lane.b32.xlu0 %v1301, 32
    %v1303 = vpop.permute.xlu0 %1302
    %v1304 = vsel %vm671, %v1303, 0
    %1306 = vmatprep.subr.mxu0 0.0
    %1307 = vmatpush1.msra.mxu0 %v667
    %1308 = vmatprep.subr.mxu0 0.0
    %1309 = vmatpush1.msra.mxu0 %v668
    %1310 = vmatprep.subr.mxu0 0.0
    %1311 = vmatpush1.msra.mxu0 %v669
    %1312 = vmatprep.subr.mxu0 0.0
    %1313 = vmatpush1.msra.mxu0 %v670
    %1314 = vmatprep.subr.mxu0 0.0
    %1315 = vmatpush1.msra.mxu0 0.0
    %1316 = vmatprep.subr.mxu0 0.0
    %1317 = vmatpush1.msra.mxu0 0.0
    %1318 = vmatprep.subr.mxu0 0.0
    %1319 = vmatpush1.msra.mxu0 0.0
    %1320 = vmatprep.subr.mxu0 0.0
    %1321 = vmatpush1.msra.mxu0 0.0
    %1322 = vmatprep.subr.mxu0 0.0
    %1323 = vmatpush1.msra.mxu0 0.0
    %1324 = vmatprep.subr.mxu0 0.0
    %1325 = vmatpush1.msra.mxu0 0.0
    %1326 = vmatprep.subr.mxu0 0.0
    %1327 = vmatpush1.msra.mxu0 0.0
    %1328 = vmatprep.subr.mxu0 0.0
    %1329 = vmatpush1.msra.mxu0 0.0
    %1330 = vmatprep.subr.mxu0 0.0
    %1331 = vmatpush1.msra.mxu0 0.0
    %1332 = vmatprep.subr.mxu0 0.0
    %1333 = vmatpush1.msra.mxu0 0.0
    %1334 = vmatprep.subr.mxu0 0.0
    %1335 = vmatpush1.msra.mxu0 0.0
    %1336 = vmatprep.subr.mxu0 0.0
    %1337 = vmatpush1.msra.mxu0 0.0
    %1338 = vmatprep.subr.mxu0 0.0
    %1339 = vmatpush1.msra.mxu0 0.0
    %1340 = vmatprep.subr.mxu0 0.0
    %1341 = vmatpush1.msra.mxu0 0.0
    %1342 = vmatprep.subr.mxu0 0.0
    %1343 = vmatpush1.msra.mxu0 0.0
    %1344 = vmatprep.subr.mxu0 0.0
    %1345 = vmatpush1.msra.mxu0 0.0
    %1346 = vmatprep.subr.mxu0 0.0
    %1347 = vmatpush1.msra.mxu0 0.0
    %1348 = vmatprep.subr.mxu0 0.0
    %1349 = vmatpush1.msra.mxu0 0.0
    %1350 = vmatprep.subr.mxu0 0.0
    %1351 = vmatpush1.msra.mxu0 0.0
    %1352 = vmatprep.subr.mxu0 0.0
    %1353 = vmatpush1.msra.mxu0 0.0
    %1354 = vmatprep.subr.mxu0 0.0
    %1355 = vmatpush1.msra.mxu0 0.0
    %1356 = vmatprep.subr.mxu0 0.0
    %1357 = vmatpush1.msra.mxu0 0.0
    %1358 = vmatprep.subr.mxu0 0.0
    %1359 = vmatpush1.msra.mxu0 0.0
    %1360 = vmatprep.subr.mxu0 0.0
    %1361 = vmatpush1.msra.mxu0 0.0
    %1362 = vmatprep.subr.mxu0 0.0
    %1363 = vmatpush1.msra.mxu0 0.0
    %1364 = vmatprep.subr.mxu0 0.0
    %1365 = vmatpush1.msra.mxu0 0.0
    %1366 = vmatprep.subr.mxu0 0.0
    %1367 = vmatpush1.msra.mxu0 0.0
    %1368 = vmatprep.subr.mxu0 0.0
    %1369 = vmatpush1.msra.mxu0 0.0
    %1370 = vmatprep.mubr.f32.mxu0 0.0
    %1371 = vmatmul.mubr.f32.gmra.mrb[0].mxu0 %v1304
    %v1372 = vpop.f32.mrb[0].mxu0
    %v1373 = vadd.f32 0.0, %v1372
    %v1374 = vpop.f32.mrb[0].mxu0
    %1375 = vdwg.mxu0
    %v1377 = vrot.slane %v1373, 4
    %v1379 = vadd.f32 %v664, %v1377
    %v1380 = vxor.u32 %v1379, 2147483648
    %v1381 = vmul.f32 %v1380, 1.442695
    %v1382 = vpow.pop %v1381
    %v1383 = vadd.f32 %v1382, 1.0
    %v1384 = vrcp.pop %v1383
    %v1385 = vmul.f32 1.0, %v1384
    %v1386 = vtanh.pop %v1379
    %v1388 = vrot.slane %v1293, 6
    %v1390 = vmul.f32 %v1385, %v1388
    %1392 = vrot.lane.b32.xlu0 %v1386, 64
    %v1393 = vpop.permute.xlu0 %1392
    %v1395 = vmul.f32 %v1385, %v1393
    %1397 = vrot.lane.b32.xlu0 %v1395, 32
    %v1398 = vpop.permute.xlu0 %1397
    %v1400 = vadd.f32 %v1390, %v1398
    %v1401 = vtanh.pop %v1400
    %1403 = vrot.lane.b32.xlu0 %v1401, 64
    %v1404 = vpop.permute.xlu0 %1403
    %v1406 = vmul.f32 %v1385, %v1404
    %v1408 = vrot.slane %v1406, 4
    %1409 = vrot.lane.b32.xlu0 %v1408, 32
    %v1410 = vpop.permute.xlu0 %1409
    %v1411 = vsel %vm671, %v1410, 0
    %1413 = vmatprep.subr.mxu0 0.0
    %1414 = vmatpush1.msra.mxu0 %v667
    %1415 = vmatprep.subr.mxu0 0.0
    %1416 = vmatpush1.msra.mxu0 %v668
    %1417 = vmatprep.subr.mxu0 0.0
    %1418 = vmatpush1.msra.mxu0 %v669
    %1419 = vmatprep.subr.mxu0 0.0
    %1420 = vmatpush1.msra.mxu0 %v670
    %1421 = vmatprep.subr.mxu0 0.0
    %1422 = vmatpush1.msra.mxu0 0.0
    %1423 = vmatprep.subr.mxu0 0.0
    %1424 = vmatpush1.msra.mxu0 0.0
    %1425 = vmatprep.subr.mxu0 0.0
    %1426 = vmatpush1.msra.mxu0 0.0
    %1427 = vmatprep.subr.mxu0 0.0
    %1428 = vmatpush1.msra.mxu0 0.0
    %1429 = vmatprep.subr.mxu0 0.0
    %1430 = vmatpush1.msra.mxu0 0.0
    %1431 = vmatprep.subr.mxu0 0.0
    %1432 = vmatpush1.msra.mxu0 0.0
    %1433 = vmatprep.subr.mxu0 0.0
    %1434 = vmatpush1.msra.mxu0 0.0
    %1435 = vmatprep.subr.mxu0 0.0
    %1436 = vmatpush1.msra.mxu0 0.0
    %1437 = vmatprep.subr.mxu0 0.0
    %1438 = vmatpush1.msra.mxu0 0.0
    %1439 = vmatprep.subr.mxu0 0.0
    %1440 = vmatpush1.msra.mxu0 0.0
    %1441 = vmatprep.subr.mxu0 0.0
    %1442 = vmatpush1.msra.mxu0 0.0
    %1443 = vmatprep.subr.mxu0 0.0
    %1444 = vmatpush1.msra.mxu0 0.0
    %1445 = vmatprep.subr.mxu0 0.0
    %1446 = vmatpush1.msra.mxu0 0.0
    %1447 = vmatprep.subr.mxu0 0.0
    %1448 = vmatpush1.msra.mxu0 0.0
    %1449 = vmatprep.subr.mxu0 0.0
    %1450 = vmatpush1.msra.mxu0 0.0
    %1451 = vmatprep.subr.mxu0 0.0
    %1452 = vmatpush1.msra.mxu0 0.0
    %1453 = vmatprep.subr.mxu0 0.0
    %1454 = vmatpush1.msra.mxu0 0.0
    %1455 = vmatprep.subr.mxu0 0.0
    %1456 = vmatpush1.msra.mxu0 0.0
    %1457 = vmatprep.subr.mxu0 0.0
    %1458 = vmatpush1.msra.mxu0 0.0
    %1459 = vmatprep.subr.mxu0 0.0
    %1460 = vmatpush1.msra.mxu0 0.0
    %1461 = vmatprep.subr.mxu0 0.0
    %1462 = vmatpush1.msra.mxu0 0.0
    %1463 = vmatprep.subr.mxu0 0.0
    %1464 = vmatpush1.msra.mxu0 0.0
    %1465 = vmatprep.subr.mxu0 0.0
    %1466 = vmatpush1.msra.mxu0 0.0
    %1467 = vmatprep.subr.mxu0 0.0
    %1468 = vmatpush1.msra.mxu0 0.0
    %1469 = vmatprep.subr.mxu0 0.0
    %1470 = vmatpush1.msra.mxu0 0.0
    %1471 = vmatprep.subr.mxu0 0.0
    %1472 = vmatpush1.msra.mxu0 0.0
    %1473 = vmatprep.subr.mxu0 0.0
    %1474 = vmatpush1.msra.mxu0 0.0
    %1475 = vmatprep.subr.mxu0 0.0
    %1476 = vmatpush1.msra.mxu0 0.0
    %1477 = vmatprep.mubr.f32.mxu0 0.0
    %1478 = vmatmul.mubr.f32.gmra.mrb[0].mxu0 %v1411
    %v1479 = vpop.f32.mrb[0].mxu0
    %v1480 = vadd.f32 0.0, %v1479
    %v1481 = vpop.f32.mrb[0].mxu0
    %1482 = vdwg.mxu0
    %v1484 = vrot.slane %v1480, 2
    %v1486 = vadd.f32 %v664, %v1484
    %v1487 = vxor.u32 %v1486, 2147483648
    %v1488 = vmul.f32 %v1487, 1.442695
    %v1489 = vpow.pop %v1488
    %v1490 = vadd.f32 %v1489, 1.0
    %v1491 = vrcp.pop %v1490
    %v1492 = vmul.f32 1.0, %v1491
    %v1493 = vtanh.pop %v1486
    %v1495 = vrot.slane %v1400, 6
    %v1497 = vmul.f32 %v1492, %v1495
    %1499 = vrot.lane.b32.xlu0 %v1493, 64
    %v1500 = vpop.permute.xlu0 %1499
    %v1502 = vmul.f32 %v1492, %v1500
    %1504 = vrot.lane.b32.xlu0 %v1502, 32
    %v1505 = vpop.permute.xlu0 %1504
    %v1507 = vadd.f32 %v1497, %v1505
    %v1508 = vtanh.pop %v1507
    %1510 = vrot.lane.b32.xlu0 %v1508, 64
    %v1511 = vpop.permute.xlu0 %1510
    %v1513 = vmul.f32 %v1492, %v1511
    %v1514 = vld [vmem:[%s8] sm:$0xff]
    %v1515 = vld [vmem:[%s8 + $0x8] sm:$0xff]
    %v1516 = vld [vmem:[%s8 + $0x10] sm:$0xff]
    %v1517 = vld [vmem:[%s8 + $0x18] sm:$0xff]
    %v1518 = vld [vmem:[%s9] sm:$0x1]
    %v1520 = vlaneseq
    %v1521 = vshrl.u32 %v1520, 7
    %v1522 = vsub.s32 0, %v1521
    %v1523 = vrot.slane %v1518, %v1522
    %v1526 = vrot.slane %v1513, 6
    %1527 = vrot.lane.b32.xlu0 %v1526, 32
    %v1528 = vpop.permute.xlu0 %1527
    %v1529 = vsel %vm671, %v1528, 0
    %1531 = vmatprep.subr.mxu0 0.0
    %1532 = vmatpush1.msra.mxu0 %v1514
    %1533 = vmatprep.subr.mxu0 0.0
    %1534 = vmatpush1.msra.mxu0 %v1515
    %1535 = vmatprep.subr.mxu0 0.0
    %1536 = vmatpush1.msra.mxu0 %v1516
    %1537 = vmatprep.subr.mxu0 0.0
    %1538 = vmatpush1.msra.mxu0 %v1517
    %1539 = vmatprep.subr.mxu0 0.0
    %1540 = vmatpush1.msra.mxu0 0.0
    %1541 = vmatprep.subr.mxu0 0.0
    %1542 = vmatpush1.msra.mxu0 0.0
    %1543 = vmatprep.subr.mxu0 0.0
    %1544 = vmatpush1.msra.mxu0 0.0
    %1545 = vmatprep.subr.mxu0 0.0
    %1546 = vmatpush1.msra.mxu0 0.0
    %1547 = vmatprep.subr.mxu0 0.0
    %1548 = vmatpush1.msra.mxu0 0.0
    %1549 = vmatprep.subr.mxu0 0.0
    %1550 = vmatpush1.msra.mxu0 0.0
    %1551 = vmatprep.subr.mxu0 0.0
    %1552 = vmatpush1.msra.mxu0 0.0
    %1553 = vmatprep.subr.mxu0 0.0
    %1554 = vmatpush1.msra.mxu0 0.0
    %1555 = vmatprep.subr.mxu0 0.0
    %1556 = vmatpush1.msra.mxu0 0.0
    %1557 = vmatprep.subr.mxu0 0.0
    %1558 = vmatpush1.msra.mxu0 0.0
    %1559 = vmatprep.subr.mxu0 0.0
    %1560 = vmatpush1.msra.mxu0 0.0
    %1561 = vmatprep.subr.mxu0 0.0
    %1562 = vmatpush1.msra.mxu0 0.0
    %1563 = vmatprep.subr.mxu0 0.0
    %1564 = vmatpush1.msra.mxu0 0.0
    %1565 = vmatprep.subr.mxu0 0.0
    %1566 = vmatpush1.msra.mxu0 0.0
    %1567 = vmatprep.subr.mxu0 0.0
    %1568 = vmatpush1.msra.mxu0 0.0
    %1569 = vmatprep.subr.mxu0 0.0
    %1570 = vmatpush1.msra.mxu0 0.0
    %1571 = vmatprep.subr.mxu0 0.0
    %1572 = vmatpush1.msra.mxu0 0.0
    %1573 = vmatprep.subr.mxu0 0.0
    %1574 = vmatpush1.msra.mxu0 0.0
    %1575 = vmatprep.subr.mxu0 0.0
    %1576 = vmatpush1.msra.mxu0 0.0
    %1577 = vmatprep.subr.mxu0 0.0
    %1578 = vmatpush1.msra.mxu0 0.0
    %1579 = vmatprep.subr.mxu0 0.0
    %1580 = vmatpush1.msra.mxu0 0.0
    %1581 = vmatprep.subr.mxu0 0.0
    %1582 = vmatpush1.msra.mxu0 0.0
    %1583 = vmatprep.subr.mxu0 0.0
    %1584 = vmatpush1.msra.mxu0 0.0
    %1585 = vmatprep.subr.mxu0 0.0
    %1586 = vmatpush1.msra.mxu0 0.0
    %1587 = vmatprep.subr.mxu0 0.0
    %1588 = vmatpush1.msra.mxu0 0.0
    %1589 = vmatprep.subr.mxu0 0.0
    %1590 = vmatpush1.msra.mxu0 0.0
    %1591 = vmatprep.subr.mxu0 0.0
    %1592 = vmatpush1.msra.mxu0 0.0
    %1593 = vmatprep.subr.mxu0 0.0
    %1594 = vmatpush1.msra.mxu0 0.0
    %1595 = vmatprep.mubr.f32.mxu0 0.0
    %1596 = vmatmul.mubr.f32.gmra.mrb[0].mxu0 %v1529
    %v1597 = vpop.f32.mrb[0].mxu0
    %v1598 = vadd.f32 %v1523, %v1597
    %v1599 = vpop.f32.mrb[0].mxu0
    %1600 = vdwg.mxu0
    %v1601 = vmax.f32 %v1598, 0.0
    %v1602 = vld [vmem:[%s10] sm:$0xff]
    %v1603 = vld [vmem:[%s10 + $0x8] sm:$0xff]
    %v1604 = vld [vmem:[%s11] sm:$0x1]
    %v1606 = vlaneseq
    %v1607 = vshrl.u32 %v1606, 7
    %v1608 = vsub.s32 0, %v1607
    %v1609 = vrot.slane %v1604, %v1608
    %v1612 = vsel %vm115, %v1601, 0
    %1614 = vmatprep.subr.mxu0 0.0
    %1615 = vmatpush1.msra.mxu0 %v1602
    %1616 = vmatprep.subr.mxu0 0.0
    %1617 = vmatpush1.msra.mxu0 %v1603
    %1618 = vmatprep.subr.mxu0 0.0
    %1619 = vmatpush1.msra.mxu0 0.0
    %1620 = vmatprep.subr.mxu0 0.0
    %1621 = vmatpush1.msra.mxu0 0.0
    %1622 = vmatprep.subr.mxu0 0.0
    %1623 = vmatpush1.msra.mxu0 0.0
    %1624 = vmatprep.subr.mxu0 0.0
    %1625 = vmatpush1.msra.mxu0 0.0
    %1626 = vmatprep.subr.mxu0 0.0
    %1627 = vmatpush1.msra.mxu0 0.0
    %1628 = vmatprep.subr.mxu0 0.0
    %1629 = vmatpush1.msra.mxu0 0.0
    %1630 = vmatprep.subr.mxu0 0.0
    %1631 = vmatpush1.msra.mxu0 0.0
    %1632 = vmatprep.subr.mxu0 0.0
    %1633 = vmatpush1.msra.mxu0 0.0
    %1634 = vmatprep.subr.mxu0 0.0
    %1635 = vmatpush1.msra.mxu0 0.0
    %1636 = vmatprep.subr.mxu0 0.0
    %1637 = vmatpush1.msra.mxu0 0.0
    %1638 = vmatprep.subr.mxu0 0.0
    %1639 = vmatpush1.msra.mxu0 0.0
    %1640 = vmatprep.subr.mxu0 0.0
    %1641 = vmatpush1.msra.mxu0 0.0
    %1642 = vmatprep.subr.mxu0 0.0
    %1643 = vmatpush1.msra.mxu0 0.0
    %1644 = vmatprep.subr.mxu0 0.0
    %1645 = vmatpush1.msra.mxu0 0.0
    %1646 = vmatprep.subr.mxu0 0.0
    %1647 = vmatpush1.msra.mxu0 0.0
    %1648 = vmatprep.subr.mxu0 0.0
    %1649 = vmatpush1.msra.mxu0 0.0
    %1650 = vmatprep.subr.mxu0 0.0
    %1651 = vmatpush1.msra.mxu0 0.0
    %1652 = vmatprep.subr.mxu0 0.0
    %1653 = vmatpush1.msra.mxu0 0.0
    %1654 = vmatprep.subr.mxu0 0.0
    %1655 = vmatpush1.msra.mxu0 0.0
    %1656 = vmatprep.subr.mxu0 0.0
    %1657 = vmatpush1.msra.mxu0 0.0
    %1658 = vmatprep.subr.mxu0 0.0
    %1659 = vmatpush1.msra.mxu0 0.0
    %1660 = vmatprep.subr.mxu0 0.0
    %1661 = vmatpush1.msra.mxu0 0.0
    %1662 = vmatprep.subr.mxu0 0.0
    %1663 = vmatpush1.msra.mxu0 0.0
    %1664 = vmatprep.subr.mxu0 0.0
    %1665 = vmatpush1.msra.mxu0 0.0
    %1666 = vmatprep.subr.mxu0 0.0
    %1667 = vmatpush1.msra.mxu0 0.0
    %1668 = vmatprep.subr.mxu0 0.0
    %1669 = vmatpush1.msra.mxu0 0.0
    %1670 = vmatprep.subr.mxu0 0.0
    %1671 = vmatpush1.msra.mxu0 0.0
    %1672 = vmatprep.subr.mxu0 0.0
    %1673 = vmatpush1.msra.mxu0 0.0
    %1674 = vmatprep.subr.mxu0 0.0
    %1675 = vmatpush1.msra.mxu0 0.0
    %1676 = vmatprep.subr.mxu0 0.0
    %1677 = vmatpush1.msra.mxu0 0.0
    %1678 = vmatprep.mubr.f32.mxu0 0.0
    %1679 = vmatmul.mubr.f32.gmra.mrb[0].mxu0 %v1612
    %v1680 = vpop.f32.mrb[0].mxu0
    %v1681 = vadd.f32 %v1609, %v1680
    %v1682 = vpop.f32.mrb[0].mxu0
    %1683 = vdwg.mxu0
    %vm1684 = vcmask 9216
    %1685 = vst.msk [vmem:[#allocation8] sm:$0x3] %vm1684, %v1681
    // Predicated region
    $region62: #{cnn_lstm_forward.1} parent=1 // pred_check
      _
    $region63: #{cnn_lstm_forward.1} parent=1 // pred_check_branch
      %1687 = sbr.rel (0) target = $region65
    $region64: #{cnn_lstm_forward.1} parent=1 // pred_region
      %s1689 = ssub.s32 32, 32
      %1690 = vsyncadd [#allocation4], %s1689
      %s1692 = sshll.u32 [#allocation8], 4
      %s1693 = int_to_ptr.vmem [resolvable:$true] %s1692
      %1695 = dma.vmem_to_hbm [thread:$0]  %s1693, 32, %s12, [#allocation4]
    $region65: #{cnn_lstm_forward.1} parent=1 // pred_fallthru
      _
    // Predicated region
    $region66: #{cnn_lstm_forward.1} parent=1 // pred_check
      _
    $region67: #{cnn_lstm_forward.1} parent=1 // pred_check_branch
      %1697 = sbr.rel (0) target = $region69
    $region68: #{cnn_lstm_forward.1} parent=1 // pred_region
      %1698 = dma.done [#allocation4], 32
    $region69: #{cnn_lstm_forward.1} parent=1 // pred_fallthru
      _
    %1699 = vsyncpa [#allocation3], 1
    %1700 = vsyncpa [#allocation6], 1
    %1701 = vsyncpa [#allocation4], 1

</llo_original>
